<compile_context>
chip_gen: v7x
topology: tpu7x:2x2x1
jax: 0.10.0
libtpu: 0.0.40
codegen_flags: <defaults>
</compile_context>

<pallas_src>
import functools
import math

import jax
import jax.numpy as jnp
from jax import lax
from jax.experimental import pallas as pl
from jax.experimental.pallas import tpu as pltpu


# ----------------------------------------------------------------------------
# Helpers
# ----------------------------------------------------------------------------
def _round_up(x, m):
    return ((x + m - 1) // m) * m


def _chunk_and_pad(total, target, align):
    """Pick chunk <= target (multiple of `align`) and the padded total.

    Prefers a divisor of the aligned total; otherwise pads the total up to a
    multiple of the target (padded tail is computed and sliced off), so an
    awkward extent never silently becomes a whole-array block.
    """
    total_a = _round_up(total, align)
    if total_a <= target:
        return total_a, total_a
    tgt = max(align, (target // align) * align)
    c = tgt
    while c >= align and total_a % c != 0:
        c -= align
    if c >= max(align, tgt // 4):
        return c, total_a
    return tgt, _round_up(total_a, tgt)


def _vmem_tile_bytes(shape, itemsize=4):
    """VMEM footprint of an f32 buffer including (8, 128) tile padding."""
    if len(shape) == 1:
        return _round_up(shape[0], 128) * 8 * itemsize
    lead = 1
    for d in shape[:-2]:
        lead *= d
    return lead * _round_up(shape[-2], 8) * _round_up(shape[-1], 128) * itemsize


# ----------------------------------------------------------------------------
# Fused kernel: u-projection + recurrence + g_x, one grid step per
# (batch_chunk, time_chunk) slab.
# ----------------------------------------------------------------------------
def _fused_kernel(x0_ref, u_ref, w1x_ref, w1u_ref, b1_ref, w2_ref, b2_ref,
                  wg1_ref, bg1_ref, wg2_ref, bg2_ref,
                  y_ref,
                  xcarry_ref, uproj_ref, xbuf_ref, *, unroll):
    t_chunk, b_chunk, n_u = u_ref.shape
    n_x = x0_ref.shape[1]
    hidden_f = w1x_ref.shape[1]
    n_y = y_ref.shape[2]

    # Initialize the carried state at the first time chunk of each batch chunk.
    @pl.when(pl.program_id(1) == 0)
    def _():
        xcarry_ref[...] = x0_ref[...]

    # ---- fused stage 1: input projection for the whole slab (one MXU matmul).
    # (t, b, n_u) -> (t*b, n_u) is a free relayout: b_chunk % 8 == 0 and the
    # lane dim is unchanged.
    u2 = u_ref[...].reshape(t_chunk * b_chunk, n_u)
    uproj2 = (jnp.dot(u2, w1u_ref[...], preferred_element_type=jnp.float32)
              + b1_ref[...])
    uproj_ref[...] = uproj2.reshape(t_chunk, b_chunk, hidden_f)

    # ---- stage 2: the sequential recurrence (only the dependent work is serial).
    w1x = w1x_ref[...]
    w2 = w2_ref[...]
    b2 = jnp.broadcast_to(b2_ref[...], (b_chunk, n_x))   # hoisted out of loop

    def body(t, x_step):
        # Store the PRE-update state (matches torch.stack of x_0 .. x_{T-1}).
        xbuf_ref[t] = x_step
        h = jnp.tanh(
            jnp.dot(x_step, w1x, preferred_element_type=jnp.float32)
            + uproj_ref[t])
        dx = jnp.dot(h, w2, preferred_element_type=jnp.float32) + b2
        return x_step + dx

    x_final = lax.fori_loop(0, t_chunk, body, xcarry_ref[...], unroll=unroll)
    xcarry_ref[...] = x_final

    # ---- fused stage 3: y = g_x(x) for the whole slab (batched MXU matmuls).
    x2 = xbuf_ref[...].reshape(t_chunk * b_chunk, n_x)
    hg = jnp.tanh(
        jnp.dot(x2, wg1_ref[...], preferred_element_type=jnp.float32)
        + bg1_ref[...])
    y2 = (jnp.dot(hg, wg2_ref[...], preferred_element_type=jnp.float32)
          + bg2_ref[...])
    y_ref[...] = y2.reshape(t_chunk, b_chunk, n_y).astype(y_ref.dtype)


# ----------------------------------------------------------------------------
# Wrapper
# ----------------------------------------------------------------------------
def state_space_simulate(x0, u, params, *, t_chunk_cap=None):
    """x0: (B, n_x), u: (B, T, n_u)  ->  y: (B, T, n_y)."""
    B, n_x = x0.shape
    _, T, n_u = u.shape
    hidden_f = params["w1x"].shape[1]
    hidden_g = params["wg1"].shape[1]
    n_y = params["wg2"].shape[1]

    # ---- chunking: batch in sublanes (multiple of 8), time on the leading dim.
    b_chunk, B_pad = _chunk_and_pad(B, 256, 8)

    # Per-time-step VMEM footprint (uproj + xbuf scratch, double-buffered u/y
    # blocks), including (8,128) lane padding of the tiny feature dims.
    lane = lambda d: _round_up(d, 128)
    per_t = 4 * b_chunk * (lane(hidden_f) + lane(n_x)
                           + 2 * lane(n_u) + 2 * lane(n_y))
    t_target = int(max(1, min(128, (24 * 2**20) // per_t)))
    if t_chunk_cap is not None:
        t_target = max(1, min(t_target, int(t_chunk_cap)))
    t_chunk, T_pad = _chunk_and_pad(T, t_target, 1)

    # Fully unroll short time chunks; keep the unroll a divisor of t_chunk.
    unroll = t_chunk if t_chunk <= 32 else max(1, math.gcd(t_chunk, 16))

    # ---- pad to chunk multiples (padded rows/steps are computed then dropped).
    x0_p = x0 if B_pad == B else jnp.pad(x0, ((0, B_pad - B), (0, 0)))
    u_p = u
    if B_pad != B or T_pad != T:
        u_p = jnp.pad(u, ((0, B_pad - B), (0, T_pad - T), (0, 0)))
    # Time-major so every in-kernel dynamic access sits on the untiled leading
    # dim; u (n_u lanes) and y (n_y lanes) are the smallest tensors, so these
    # two layout passes are cheap next to the removed uproj/x HBM round-trips.
    u_tm = jnp.transpose(u_p, (1, 0, 2))               # (T_pad, B_pad, n_u)

    # ---- VMEM budget (double-buffered blocks + scratch), with headroom,
    #      capped so the request is valid on v5e/v6e (128 MiB) and v7x (64 MiB).
    est = (2 * (_vmem_tile_bytes((t_chunk, b_chunk, n_u))
                + _vmem_tile_bytes((t_chunk, b_chunk, n_y))
                + _vmem_tile_bytes((b_chunk, n_x))
                + _vmem_tile_bytes((n_x, hidden_f))
                + _vmem_tile_bytes((n_u, hidden_f))
                + _vmem_tile_bytes((hidden_f, n_x))
                + _vmem_tile_bytes((n_x, hidden_g))
                + _vmem_tile_bytes((hidden_g, n_y))
                + 4 * _vmem_tile_bytes((1, max(hidden_f, hidden_g))))
           + _vmem_tile_bytes((b_chunk, n_x))
           + _vmem_tile_bytes((t_chunk, b_chunk, hidden_f))
           + _vmem_tile_bytes((t_chunk, b_chunk, n_x)))
    vmem_limit = int(min(48 * 2**20, max(32 * 2**20, est + 8 * 2**20)))

    grid = (B_pad // b_chunk, T_pad // t_chunk)
    kernel = functools.partial(_fused_kernel, unroll=unroll)

    y_tm = pl.pallas_call(
        kernel,
        out_shape=jax.ShapeDtypeStruct((T_pad, B_pad, n_y), jnp.float32),
        grid=grid,
        in_specs=[
            pl.BlockSpec((b_chunk, n_x), lambda b, c: (b, 0)),              # x0
            pl.BlockSpec((t_chunk, b_chunk, n_u), lambda b, c: (c, b, 0)),  # u
            pl.BlockSpec((n_x, hidden_f), lambda b, c: (0, 0)),             # w1x
            pl.BlockSpec((n_u, hidden_f), lambda b, c: (0, 0)),             # w1u
            pl.BlockSpec((1, hidden_f), lambda b, c: (0, 0)),               # b1
            pl.BlockSpec((hidden_f, n_x), lambda b, c: (0, 0)),             # w2
            pl.BlockSpec((1, n_x), lambda b, c: (0, 0)),                    # b2
            pl.BlockSpec((n_x, hidden_g), lambda b, c: (0, 0)),             # wg1
            pl.BlockSpec((1, hidden_g), lambda b, c: (0, 0)),               # bg1
            pl.BlockSpec((hidden_g, n_y), lambda b, c: (0, 0)),             # wg2
            pl.BlockSpec((1, n_y), lambda b, c: (0, 0)),                    # bg2
        ],
        out_specs=pl.BlockSpec((t_chunk, b_chunk, n_y), lambda b, c: (c, b, 0)),
        scratch_shapes=[
            pltpu.VMEM((b_chunk, n_x), jnp.float32),                # x carry
            pltpu.VMEM((t_chunk, b_chunk, hidden_f), jnp.float32),  # uproj slab
            pltpu.VMEM((t_chunk, b_chunk, n_x), jnp.float32),       # x trajectory
        ],
        compiler_params=pltpu.CompilerParams(
            dimension_semantics=("parallel", "arbitrary"),
            vmem_limit_bytes=vmem_limit),
    )(x0_p, u_tm, params["w1x"], params["w1u"], params["b1"], params["w2"],
      params["b2"], params["wg1"], params["bg1"], params["wg2"], params["bg2"])

    return jnp.transpose(y_tm[:T, :B, :], (1, 0, 2))    # (B, T, n_y)


# ----------------------------------------------------------------------------
# Pure-JAX reference (mirrors the PyTorch forward) for a correctness check.
# ----------------------------------------------------------------------------
def reference_forward(x0, u, params):
    def f_xu(xu):
        h = jnp.tanh(xu @ jnp.concatenate([params["w1x"], params["w1u"]], 0)
                     + params["b1"])
        return h @ params["w2"] + params["b2"]

    def g_x(x):
        h = jnp.tanh(x @ params["wg1"] + params["bg1"])
        return h @ params["wg2"] + params["bg2"]

    T = u.shape[1]
    xs = []
    x_step = x0
    for t in range(T):
        u_t = u[:, t, :]
        xs.append(x_step)
        dx = f_xu(jnp.concatenate([x_step, u_t], axis=-1))
        x_step = x_step + dx
    x = jnp.stack(xs, axis=1)                            # (B, T, n_x)
    return g_x(x)                                        # (B, T, n_y)


def make_params(key, n_x, n_u, hidden_f, hidden_g, n_y):
    ks = jax.random.split(key, 8)
    scale = 0.3
    return {
        # f_xu: Linear(n_x + n_u -> hidden_f) -> tanh -> Linear(hidden_f -> n_x)
        "w1x": scale * jax.random.normal(ks[0], (n_x, hidden_f), jnp.float32),
        "w1u": scale * jax.random.normal(ks[1], (n_u, hidden_f), jnp.float32),
        "b1": scale * jax.random.normal(ks[2], (1, hidden_f), jnp.float32),
        "w2": scale * jax.random.normal(ks[3], (hidden_f, n_x), jnp.float32),
        "b2": scale * jax.random.normal(ks[4], (1, n_x), jnp.float32),
        # g_x: Linear(n_x -> hidden_g) -> tanh -> Linear(hidden_g -> n_y)
        "wg1": scale * jax.random.normal(ks[5], (n_x, hidden_g), jnp.float32),
        "bg1": scale * jax.random.normal(ks[6], (1, hidden_g), jnp.float32),
        "wg2": scale * jax.random.normal(ks[7], (hidden_g, n_y), jnp.float32),
        "bg2": jnp.zeros((1, n_y), jnp.float32),
    }


if __name__ == "__main__":
    n_x, n_u, n_y = 4, 2, 3
    hidden_f, hidden_g = 32, 16

    key = jax.random.PRNGKey(0)
    k_x0, k_u, k_p, k_x0b, k_ub = jax.random.split(key, 5)
    params = make_params(k_p, n_x, n_u, hidden_f, hidden_g, n_y)

    # Test 1: aligned batch, single time chunk.
    B, T = 8, 12
    x0 = jax.random.normal(k_x0, (B, n_x), jnp.float32)
    u = jax.random.normal(k_u, (B, T, n_u), jnp.float32)
    y = jax.block_until_ready(state_space_simulate(x0, u, params))
    y_ref = reference_forward(x0, u, params)
    assert y.shape == (B, T, n_y)
    assert jnp.allclose(y, y_ref, atol=1e-3, rtol=1e-3), "mismatch (test 1)"

    # Test 2: ragged batch (exercises padding) + small forced time chunks
    # (exercises the state carry across sequential grid steps).
    B2, T2 = 3, 10
    x0b = jax.random.normal(k_x0b, (B2, n_x), jnp.float32)
    ub = jax.random.normal(k_ub, (B2, T2, n_u), jnp.float32)
    yb = jax.block_until_ready(
        state_space_simulate(x0b, ub, params, t_chunk_cap=4))
    yb_ref = reference_forward(x0b, ub, params)
    assert yb.shape == (B2, T2, n_y)
    assert jnp.allclose(yb, yb_ref, atol=1e-3, rtol=1e-3), "mismatch (test 2)"

    print("KERNEL_OK")
</pallas_src>

<mosaic_0001>
module attributes {stable_mosaic.version = 11 : i64} {
  func.func @_fused_kernel(%arg0: i32, %arg1: i32, %arg2: memref<8x4xf32, #tpu.memory_space<vmem>>, %arg3: memref<12x8x2xf32, #tpu.memory_space<vmem>>, %arg4: memref<4x32xf32, #tpu.memory_space<vmem>>, %arg5: memref<2x32xf32, #tpu.memory_space<vmem>>, %arg6: memref<1x32xf32, #tpu.memory_space<vmem>>, %arg7: memref<32x4xf32, #tpu.memory_space<vmem>>, %arg8: memref<1x4xf32, #tpu.memory_space<vmem>>, %arg9: memref<4x16xf32, #tpu.memory_space<vmem>>, %arg10: memref<1x16xf32, #tpu.memory_space<vmem>>, %arg11: memref<16x3xf32, #tpu.memory_space<vmem>>, %arg12: memref<1x3xf32, #tpu.memory_space<vmem>>, %arg13: memref<12x8x3xf32, #tpu.memory_space<vmem>>, %arg14: memref<8x4xf32, #tpu.memory_space<vmem>>, %arg15: memref<12x8x32xf32, #tpu.memory_space<vmem>>, %arg16: memref<12x8x4xf32, #tpu.memory_space<vmem>>) attributes {dimension_semantics = [#tpu.dimension_semantics<parallel>, #tpu.dimension_semantics<arbitrary>], iteration_bounds = array<i64: 1, 1>, scalar_prefetch = 0 : i64, scratch_operands = 3 : i64, tpu.core_type = #tpu.core_type<tc>, window_params = [{transform_indices = @transform_0, window_bounds = array<i64: 8, 4>}, {transform_indices = @transform_1, window_bounds = array<i64: 12, 8, 2>}, {pipeline_mode = #tpu.pipeline_mode<synchronous>, transform_indices = @transform_2, window_bounds = array<i64: 4, 32>}, {pipeline_mode = #tpu.pipeline_mode<synchronous>, transform_indices = @transform_3, window_bounds = array<i64: 2, 32>}, {pipeline_mode = #tpu.pipeline_mode<synchronous>, transform_indices = @transform_4, window_bounds = array<i64: 1, 32>}, {pipeline_mode = #tpu.pipeline_mode<synchronous>, transform_indices = @transform_5, window_bounds = array<i64: 32, 4>}, {pipeline_mode = #tpu.pipeline_mode<synchronous>, transform_indices = @transform_6, window_bounds = array<i64: 1, 4>}, {pipeline_mode = #tpu.pipeline_mode<synchronous>, transform_indices = @transform_7, window_bounds = array<i64: 4, 16>}, {pipeline_mode = #tpu.pipeline_mode<synchronous>, transform_indices = @transform_8, window_bounds = array<i64: 1, 16>}, {pipeline_mode = #tpu.pipeline_mode<synchronous>, transform_indices = @transform_9, window_bounds = array<i64: 16, 3>}, {pipeline_mode = #tpu.pipeline_mode<synchronous>, transform_indices = @transform_10, window_bounds = array<i64: 1, 3>}, {transform_indices = @transform_11, window_bounds = array<i64: 12, 8, 3>}]} {
    %c0_i32 = arith.constant 0 : i32
    %0 = arith.cmpi eq, %arg1, %c0_i32 : i32
    %1 = arith.extui %0 : i1 to i32
    %c0_i32_0 = arith.constant 0 : i32
    %2 = arith.cmpi ne, %1, %c0_i32_0 : i32
    scf.if %2 {
      %c0_109 = arith.constant 0 : index
      %c0_110 = arith.constant 0 : index
      %190 = vector.load %arg2[%c0_109, %c0_110] : memref<8x4xf32, #tpu.memory_space<vmem>>, vector<8x4xf32>
      %c0_111 = arith.constant 0 : index
      %c0_112 = arith.constant 0 : index
      %191 = vector.load %arg14[%c0_111, %c0_112] : memref<8x4xf32, #tpu.memory_space<vmem>>, vector<8x4xf32>
      tpu.vector_store %arg14[%c0_111, %c0_112], %190 {strides = array<i32>} : memref<8x4xf32, #tpu.memory_space<vmem>>, vector<8x4xf32>,
    } else {
    }
    %c0 = arith.constant 0 : index
    %c0_1 = arith.constant 0 : index
    %c0_2 = arith.constant 0 : index
    %3 = vector.load %arg3[%c0, %c0_1, %c0_2] : memref<12x8x2xf32, #tpu.memory_space<vmem>>, vector<12x8x2xf32>
    %4 = vector.shape_cast %3 : vector<12x8x2xf32> to vector<96x2xf32>
    %c0_3 = arith.constant 0 : index
    %c0_4 = arith.constant 0 : index
    %5 = vector.load %arg5[%c0_3, %c0_4] : memref<2x32xf32, #tpu.memory_space<vmem>>, vector<2x32xf32>
    %cst = arith.constant dense<0.000000e+00> : vector<96x32xf32>
    %6 = tpu.matmul %4, %5, %cst {dimension_numbers = #tpu.dot_dimension_numbers<[1], [0], [0], [1], [0, 0, 1, 1], [], []>} : vector<96x2xf32>, vector<2x32xf32>, vector<96x32xf32> -> vector<96x32xf32>
    %c0_5 = arith.constant 0 : index
    %c0_6 = arith.constant 0 : index
    %7 = vector.load %arg6[%c0_5, %c0_6] : memref<1x32xf32, #tpu.memory_space<vmem>>, vector<1x32xf32>
    %8 = vector.broadcast %7 : vector<1x32xf32> to vector<96x32xf32>
    %9 = arith.addf %6, %8 : vector<96x32xf32>
    %10 = vector.shape_cast %9 : vector<96x32xf32> to vector<12x8x32xf32>
    %c0_7 = arith.constant 0 : index
    %c0_8 = arith.constant 0 : index
    %c0_9 = arith.constant 0 : index
    %11 = vector.load %arg15[%c0_7, %c0_8, %c0_9] : memref<12x8x32xf32, #tpu.memory_space<vmem>>, vector<12x8x32xf32>
    tpu.vector_store %arg15[%c0_7, %c0_8, %c0_9], %10 {strides = array<i32>} : memref<12x8x32xf32, #tpu.memory_space<vmem>>, vector<12x8x32xf32>,
    %c0_10 = arith.constant 0 : index
    %c0_11 = arith.constant 0 : index
    %12 = vector.load %arg4[%c0_10, %c0_11] : memref<4x32xf32, #tpu.memory_space<vmem>>, vector<4x32xf32>
    %c0_12 = arith.constant 0 : index
    %c0_13 = arith.constant 0 : index
    %13 = vector.load %arg7[%c0_12, %c0_13] : memref<32x4xf32, #tpu.memory_space<vmem>>, vector<32x4xf32>
    %c0_14 = arith.constant 0 : index
    %c0_15 = arith.constant 0 : index
    %14 = vector.load %arg8[%c0_14, %c0_15] : memref<1x4xf32, #tpu.memory_space<vmem>>, vector<1x4xf32>
    %15 = vector.shape_cast %14 : vector<1x4xf32> to vector<1x4xf32>
    %16 = vector.broadcast %15 : vector<1x4xf32> to vector<8x4xf32>
    %c0_16 = arith.constant 0 : index
    %c0_17 = arith.constant 0 : index
    %17 = vector.load %arg14[%c0_16, %c0_17] : memref<8x4xf32, #tpu.memory_space<vmem>>, vector<8x4xf32>
    %c0_i32_18 = arith.constant 0 : i32
    %18 = arith.index_cast %c0_i32_18 : i32 to index
    %c0_19 = arith.constant 0 : index
    %c0_20 = arith.constant 0 : index
    %19 = vector.load %arg16[%18, %c0_19, %c0_20] : memref<12x8x4xf32, #tpu.memory_space<vmem>>, vector<1x8x4xf32>
    %20 = vector.shape_cast %19 : vector<1x8x4xf32> to vector<8x4xf32>
    %21 = vector.shape_cast %17 : vector<8x4xf32> to vector<1x8x4xf32>
    tpu.vector_store %arg16[%18, %c0_19, %c0_20], %21 {strides = array<i32>} : memref<12x8x4xf32, #tpu.memory_space<vmem>>, vector<1x8x4xf32>,
    %cst_21 = arith.constant dense<0.000000e+00> : vector<8x32xf32>
    %22 = tpu.matmul %17, %12, %cst_21 {dimension_numbers = #tpu.dot_dimension_numbers<[1], [0], [0], [1], [0, 0, 1, 1], [], []>} : vector<8x4xf32>, vector<4x32xf32>, vector<8x32xf32> -> vector<8x32xf32>
    %23 = arith.index_cast %c0_i32_18 : i32 to index
    %c0_22 = arith.constant 0 : index
    %c0_23 = arith.constant 0 : index
    %24 = vector.load %arg15[%23, %c0_22, %c0_23] : memref<12x8x32xf32, #tpu.memory_space<vmem>>, vector<1x8x32xf32>
    %25 = vector.shape_cast %24 : vector<1x8x32xf32> to vector<8x32xf32>
    %26 = arith.addf %22, %25 : vector<8x32xf32>
    %27 = math.tanh %26 : vector<8x32xf32>
    %cst_24 = arith.constant dense<0.000000e+00> : vector<8x4xf32>
    %28 = tpu.matmul %27, %13, %cst_24 {dimension_numbers = #tpu.dot_dimension_numbers<[1], [0], [0], [1], [0, 0, 1, 1], [], []>} : vector<8x32xf32>, vector<32x4xf32>, vector<8x4xf32> -> vector<8x4xf32>
    %29 = arith.addf %28, %16 : vector<8x4xf32>
    %30 = arith.addf %17, %29 : vector<8x4xf32>
    %c1_i32 = arith.constant 1 : i32
    %31 = arith.index_cast %c1_i32 : i32 to index
    %c0_25 = arith.constant 0 : index
    %c0_26 = arith.constant 0 : index
    %32 = vector.load %arg16[%31, %c0_25, %c0_26] : memref<12x8x4xf32, #tpu.memory_space<vmem>>, vector<1x8x4xf32>
    %33 = vector.shape_cast %32 : vector<1x8x4xf32> to vector<8x4xf32>
    %34 = vector.shape_cast %30 : vector<8x4xf32> to vector<1x8x4xf32>
    tpu.vector_store %arg16[%31, %c0_25, %c0_26], %34 {strides = array<i32>} : memref<12x8x4xf32, #tpu.memory_space<vmem>>, vector<1x8x4xf32>,
    %cst_27 = arith.constant dense<0.000000e+00> : vector<8x32xf32>
    %35 = tpu.matmul %30, %12, %cst_27 {dimension_numbers = #tpu.dot_dimension_numbers<[1], [0], [0], [1], [0, 0, 1, 1], [], []>} : vector<8x4xf32>, vector<4x32xf32>, vector<8x32xf32> -> vector<8x32xf32>
    %36 = arith.index_cast %c1_i32 : i32 to index
    %c0_28 = arith.constant 0 : index
    %c0_29 = arith.constant 0 : index
    %37 = vector.load %arg15[%36, %c0_28, %c0_29] : memref<12x8x32xf32, #tpu.memory_space<vmem>>, vector<1x8x32xf32>
    %38 = vector.shape_cast %37 : vector<1x8x32xf32> to vector<8x32xf32>
    %39 = arith.addf %35, %38 : vector<8x32xf32>
    %40 = math.tanh %39 : vector<8x32xf32>
    %cst_30 = arith.constant dense<0.000000e+00> : vector<8x4xf32>
    %41 = tpu.matmul %40, %13, %cst_30 {dimension_numbers = #tpu.dot_dimension_numbers<[1], [0], [0], [1], [0, 0, 1, 1], [], []>} : vector<8x32xf32>, vector<32x4xf32>, vector<8x4xf32> -> vector<8x4xf32>
    %42 = arith.addf %41, %16 : vector<8x4xf32>
    %43 = arith.addf %30, %42 : vector<8x4xf32>
    %c2_i32 = arith.constant 2 : i32
    %44 = arith.index_cast %c2_i32 : i32 to index
    %c0_31 = arith.constant 0 : index
    %c0_32 = arith.constant 0 : index
    %45 = vector.load %arg16[%44, %c0_31, %c0_32] : memref<12x8x4xf32, #tpu.memory_space<vmem>>, vector<1x8x4xf32>
    %46 = vector.shape_cast %45 : vector<1x8x4xf32> to vector<8x4xf32>
    %47 = vector.shape_cast %43 : vector<8x4xf32> to vector<1x8x4xf32>
    tpu.vector_store %arg16[%44, %c0_31, %c0_32], %47 {strides = array<i32>} : memref<12x8x4xf32, #tpu.memory_space<vmem>>, vector<1x8x4xf32>,
    %cst_33 = arith.constant dense<0.000000e+00> : vector<8x32xf32>
    %48 = tpu.matmul %43, %12, %cst_33 {dimension_numbers = #tpu.dot_dimension_numbers<[1], [0], [0], [1], [0, 0, 1, 1], [], []>} : vector<8x4xf32>, vector<4x32xf32>, vector<8x32xf32> -> vector<8x32xf32>
    %49 = arith.index_cast %c2_i32 : i32 to index
    %c0_34 = arith.constant 0 : index
    %c0_35 = arith.constant 0 : index
    %50 = vector.load %arg15[%49, %c0_34, %c0_35] : memref<12x8x32xf32, #tpu.memory_space<vmem>>, vector<1x8x32xf32>
    %51 = vector.shape_cast %50 : vector<1x8x32xf32> to vector<8x32xf32>
    %52 = arith.addf %48, %51 : vector<8x32xf32>
    %53 = math.tanh %52 : vector<8x32xf32>
    %cst_36 = arith.constant dense<0.000000e+00> : vector<8x4xf32>
    %54 = tpu.matmul %53, %13, %cst_36 {dimension_numbers = #tpu.dot_dimension_numbers<[1], [0], [0], [1], [0, 0, 1, 1], [], []>} : vector<8x32xf32>, vector<32x4xf32>, vector<8x4xf32> -> vector<8x4xf32>
    %55 = arith.addf %54, %16 : vector<8x4xf32>
    %56 = arith.addf %43, %55 : vector<8x4xf32>
    %c3_i32 = arith.constant 3 : i32
    %57 = arith.index_cast %c3_i32 : i32 to index
    %c0_37 = arith.constant 0 : index
    %c0_38 = arith.constant 0 : index
    %58 = vector.load %arg16[%57, %c0_37, %c0_38] : memref<12x8x4xf32, #tpu.memory_space<vmem>>, vector<1x8x4xf32>
    %59 = vector.shape_cast %58 : vector<1x8x4xf32> to vector<8x4xf32>
    %60 = vector.shape_cast %56 : vector<8x4xf32> to vector<1x8x4xf32>
    tpu.vector_store %arg16[%57, %c0_37, %c0_38], %60 {strides = array<i32>} : memref<12x8x4xf32, #tpu.memory_space<vmem>>, vector<1x8x4xf32>,
    %cst_39 = arith.constant dense<0.000000e+00> : vector<8x32xf32>
    %61 = tpu.matmul %56, %12, %cst_39 {dimension_numbers = #tpu.dot_dimension_numbers<[1], [0], [0], [1], [0, 0, 1, 1], [], []>} : vector<8x4xf32>, vector<4x32xf32>, vector<8x32xf32> -> vector<8x32xf32>
    %62 = arith.index_cast %c3_i32 : i32 to index
    %c0_40 = arith.constant 0 : index
    %c0_41 = arith.constant 0 : index
    %63 = vector.load %arg15[%62, %c0_40, %c0_41] : memref<12x8x32xf32, #tpu.memory_space<vmem>>, vector<1x8x32xf32>
    %64 = vector.shape_cast %63 : vector<1x8x32xf32> to vector<8x32xf32>
    %65 = arith.addf %61, %64 : vector<8x32xf32>
    %66 = math.tanh %65 : vector<8x32xf32>
    %cst_42 = arith.constant dense<0.000000e+00> : vector<8x4xf32>
    %67 = tpu.matmul %66, %13, %cst_42 {dimension_numbers = #tpu.dot_dimension_numbers<[1], [0], [0], [1], [0, 0, 1, 1], [], []>} : vector<8x32xf32>, vector<32x4xf32>, vector<8x4xf32> -> vector<8x4xf32>
    %68 = arith.addf %67, %16 : vector<8x4xf32>
    %69 = arith.addf %56, %68 : vector<8x4xf32>
    %c4_i32 = arith.constant 4 : i32
    %70 = arith.index_cast %c4_i32 : i32 to index
    %c0_43 = arith.constant 0 : index
    %c0_44 = arith.constant 0 : index
    %71 = vector.load %arg16[%70, %c0_43, %c0_44] : memref<12x8x4xf32, #tpu.memory_space<vmem>>, vector<1x8x4xf32>
    %72 = vector.shape_cast %71 : vector<1x8x4xf32> to vector<8x4xf32>
    %73 = vector.shape_cast %69 : vector<8x4xf32> to vector<1x8x4xf32>
    tpu.vector_store %arg16[%70, %c0_43, %c0_44], %73 {strides = array<i32>} : memref<12x8x4xf32, #tpu.memory_space<vmem>>, vector<1x8x4xf32>,
    %cst_45 = arith.constant dense<0.000000e+00> : vector<8x32xf32>
    %74 = tpu.matmul %69, %12, %cst_45 {dimension_numbers = #tpu.dot_dimension_numbers<[1], [0], [0], [1], [0, 0, 1, 1], [], []>} : vector<8x4xf32>, vector<4x32xf32>, vector<8x32xf32> -> vector<8x32xf32>
    %75 = arith.index_cast %c4_i32 : i32 to index
    %c0_46 = arith.constant 0 : index
    %c0_47 = arith.constant 0 : index
    %76 = vector.load %arg15[%75, %c0_46, %c0_47] : memref<12x8x32xf32, #tpu.memory_space<vmem>>, vector<1x8x32xf32>
    %77 = vector.shape_cast %76 : vector<1x8x32xf32> to vector<8x32xf32>
    %78 = arith.addf %74, %77 : vector<8x32xf32>
    %79 = math.tanh %78 : vector<8x32xf32>
    %cst_48 = arith.constant dense<0.000000e+00> : vector<8x4xf32>
    %80 = tpu.matmul %79, %13, %cst_48 {dimension_numbers = #tpu.dot_dimension_numbers<[1], [0], [0], [1], [0, 0, 1, 1], [], []>} : vector<8x32xf32>, vector<32x4xf32>, vector<8x4xf32> -> vector<8x4xf32>
    %81 = arith.addf %80, %16 : vector<8x4xf32>
    %82 = arith.addf %69, %81 : vector<8x4xf32>
    %c5_i32 = arith.constant 5 : i32
    %83 = arith.index_cast %c5_i32 : i32 to index
    %c0_49 = arith.constant 0 : index
    %c0_50 = arith.constant 0 : index
    %84 = vector.load %arg16[%83, %c0_49, %c0_50] : memref<12x8x4xf32, #tpu.memory_space<vmem>>, vector<1x8x4xf32>
    %85 = vector.shape_cast %84 : vector<1x8x4xf32> to vector<8x4xf32>
    %86 = vector.shape_cast %82 : vector<8x4xf32> to vector<1x8x4xf32>
    tpu.vector_store %arg16[%83, %c0_49, %c0_50], %86 {strides = array<i32>} : memref<12x8x4xf32, #tpu.memory_space<vmem>>, vector<1x8x4xf32>,
    %cst_51 = arith.constant dense<0.000000e+00> : vector<8x32xf32>
    %87 = tpu.matmul %82, %12, %cst_51 {dimension_numbers = #tpu.dot_dimension_numbers<[1], [0], [0], [1], [0, 0, 1, 1], [], []>} : vector<8x4xf32>, vector<4x32xf32>, vector<8x32xf32> -> vector<8x32xf32>
    %88 = arith.index_cast %c5_i32 : i32 to index
    %c0_52 = arith.constant 0 : index
    %c0_53 = arith.constant 0 : index
    %89 = vector.load %arg15[%88, %c0_52, %c0_53] : memref<12x8x32xf32, #tpu.memory_space<vmem>>, vector<1x8x32xf32>
    %90 = vector.shape_cast %89 : vector<1x8x32xf32> to vector<8x32xf32>
    %91 = arith.addf %87, %90 : vector<8x32xf32>
    %92 = math.tanh %91 : vector<8x32xf32>
    %cst_54 = arith.constant dense<0.000000e+00> : vector<8x4xf32>
    %93 = tpu.matmul %92, %13, %cst_54 {dimension_numbers = #tpu.dot_dimension_numbers<[1], [0], [0], [1], [0, 0, 1, 1], [], []>} : vector<8x32xf32>, vector<32x4xf32>, vector<8x4xf32> -> vector<8x4xf32>
    %94 = arith.addf %93, %16 : vector<8x4xf32>
    %95 = arith.addf %82, %94 : vector<8x4xf32>
    %c6_i32 = arith.constant 6 : i32
    %96 = arith.index_cast %c6_i32 : i32 to index
    %c0_55 = arith.constant 0 : index
    %c0_56 = arith.constant 0 : index
    %97 = vector.load %arg16[%96, %c0_55, %c0_56] : memref<12x8x4xf32, #tpu.memory_space<vmem>>, vector<1x8x4xf32>
    %98 = vector.shape_cast %97 : vector<1x8x4xf32> to vector<8x4xf32>
    %99 = vector.shape_cast %95 : vector<8x4xf32> to vector<1x8x4xf32>
    tpu.vector_store %arg16[%96, %c0_55, %c0_56], %99 {strides = array<i32>} : memref<12x8x4xf32, #tpu.memory_space<vmem>>, vector<1x8x4xf32>,
    %cst_57 = arith.constant dense<0.000000e+00> : vector<8x32xf32>
    %100 = tpu.matmul %95, %12, %cst_57 {dimension_numbers = #tpu.dot_dimension_numbers<[1], [0], [0], [1], [0, 0, 1, 1], [], []>} : vector<8x4xf32>, vector<4x32xf32>, vector<8x32xf32> -> vector<8x32xf32>
    %101 = arith.index_cast %c6_i32 : i32 to index
    %c0_58 = arith.constant 0 : index
    %c0_59 = arith.constant 0 : index
    %102 = vector.load %arg15[%101, %c0_58, %c0_59] : memref<12x8x32xf32, #tpu.memory_space<vmem>>, vector<1x8x32xf32>
    %103 = vector.shape_cast %102 : vector<1x8x32xf32> to vector<8x32xf32>
    %104 = arith.addf %100, %103 : vector<8x32xf32>
    %105 = math.tanh %104 : vector<8x32xf32>
    %cst_60 = arith.constant dense<0.000000e+00> : vector<8x4xf32>
    %106 = tpu.matmul %105, %13, %cst_60 {dimension_numbers = #tpu.dot_dimension_numbers<[1], [0], [0], [1], [0, 0, 1, 1], [], []>} : vector<8x32xf32>, vector<32x4xf32>, vector<8x4xf32> -> vector<8x4xf32>
    %107 = arith.addf %106, %16 : vector<8x4xf32>
    %108 = arith.addf %95, %107 : vector<8x4xf32>
    %c7_i32 = arith.constant 7 : i32
    %109 = arith.index_cast %c7_i32 : i32 to index
    %c0_61 = arith.constant 0 : index
    %c0_62 = arith.constant 0 : index
    %110 = vector.load %arg16[%109, %c0_61, %c0_62] : memref<12x8x4xf32, #tpu.memory_space<vmem>>, vector<1x8x4xf32>
    %111 = vector.shape_cast %110 : vector<1x8x4xf32> to vector<8x4xf32>
    %112 = vector.shape_cast %108 : vector<8x4xf32> to vector<1x8x4xf32>
    tpu.vector_store %arg16[%109, %c0_61, %c0_62], %112 {strides = array<i32>} : memref<12x8x4xf32, #tpu.memory_space<vmem>>, vector<1x8x4xf32>,
    %cst_63 = arith.constant dense<0.000000e+00> : vector<8x32xf32>
    %113 = tpu.matmul %108, %12, %cst_63 {dimension_numbers = #tpu.dot_dimension_numbers<[1], [0], [0], [1], [0, 0, 1, 1], [], []>} : vector<8x4xf32>, vector<4x32xf32>, vector<8x32xf32> -> vector<8x32xf32>
    %114 = arith.index_cast %c7_i32 : i32 to index
    %c0_64 = arith.constant 0 : index
    %c0_65 = arith.constant 0 : index
    %115 = vector.load %arg15[%114, %c0_64, %c0_65] : memref<12x8x32xf32, #tpu.memory_space<vmem>>, vector<1x8x32xf32>
    %116 = vector.shape_cast %115 : vector<1x8x32xf32> to vector<8x32xf32>
    %117 = arith.addf %113, %116 : vector<8x32xf32>
    %118 = math.tanh %117 : vector<8x32xf32>
    %cst_66 = arith.constant dense<0.000000e+00> : vector<8x4xf32>
    %119 = tpu.matmul %118, %13, %cst_66 {dimension_numbers = #tpu.dot_dimension_numbers<[1], [0], [0], [1], [0, 0, 1, 1], [], []>} : vector<8x32xf32>, vector<32x4xf32>, vector<8x4xf32> -> vector<8x4xf32>
    %120 = arith.addf %119, %16 : vector<8x4xf32>
    %121 = arith.addf %108, %120 : vector<8x4xf32>
    %c8_i32 = arith.constant 8 : i32
    %122 = arith.index_cast %c8_i32 : i32 to index
    %c0_67 = arith.constant 0 : index
    %c0_68 = arith.constant 0 : index
    %123 = vector.load %arg16[%122, %c0_67, %c0_68] : memref<12x8x4xf32, #tpu.memory_space<vmem>>, vector<1x8x4xf32>
    %124 = vector.shape_cast %123 : vector<1x8x4xf32> to vector<8x4xf32>
    %125 = vector.shape_cast %121 : vector<8x4xf32> to vector<1x8x4xf32>
    tpu.vector_store %arg16[%122, %c0_67, %c0_68], %125 {strides = array<i32>} : memref<12x8x4xf32, #tpu.memory_space<vmem>>, vector<1x8x4xf32>,
    %cst_69 = arith.constant dense<0.000000e+00> : vector<8x32xf32>
    %126 = tpu.matmul %121, %12, %cst_69 {dimension_numbers = #tpu.dot_dimension_numbers<[1], [0], [0], [1], [0, 0, 1, 1], [], []>} : vector<8x4xf32>, vector<4x32xf32>, vector<8x32xf32> -> vector<8x32xf32>
    %127 = arith.index_cast %c8_i32 : i32 to index
    %c0_70 = arith.constant 0 : index
    %c0_71 = arith.constant 0 : index
    %128 = vector.load %arg15[%127, %c0_70, %c0_71] : memref<12x8x32xf32, #tpu.memory_space<vmem>>, vector<1x8x32xf32>
    %129 = vector.shape_cast %128 : vector<1x8x32xf32> to vector<8x32xf32>
    %130 = arith.addf %126, %129 : vector<8x32xf32>
    %131 = math.tanh %130 : vector<8x32xf32>
    %cst_72 = arith.constant dense<0.000000e+00> : vector<8x4xf32>
    %132 = tpu.matmul %131, %13, %cst_72 {dimension_numbers = #tpu.dot_dimension_numbers<[1], [0], [0], [1], [0, 0, 1, 1], [], []>} : vector<8x32xf32>, vector<32x4xf32>, vector<8x4xf32> -> vector<8x4xf32>
    %133 = arith.addf %132, %16 : vector<8x4xf32>
    %134 = arith.addf %121, %133 : vector<8x4xf32>
    %c9_i32 = arith.constant 9 : i32
    %135 = arith.index_cast %c9_i32 : i32 to index
    %c0_73 = arith.constant 0 : index
    %c0_74 = arith.constant 0 : index
    %136 = vector.load %arg16[%135, %c0_73, %c0_74] : memref<12x8x4xf32, #tpu.memory_space<vmem>>, vector<1x8x4xf32>
    %137 = vector.shape_cast %136 : vector<1x8x4xf32> to vector<8x4xf32>
    %138 = vector.shape_cast %134 : vector<8x4xf32> to vector<1x8x4xf32>
    tpu.vector_store %arg16[%135, %c0_73, %c0_74], %138 {strides = array<i32>} : memref<12x8x4xf32, #tpu.memory_space<vmem>>, vector<1x8x4xf32>,
    %cst_75 = arith.constant dense<0.000000e+00> : vector<8x32xf32>
    %139 = tpu.matmul %134, %12, %cst_75 {dimension_numbers = #tpu.dot_dimension_numbers<[1], [0], [0], [1], [0, 0, 1, 1], [], []>} : vector<8x4xf32>, vector<4x32xf32>, vector<8x32xf32> -> vector<8x32xf32>
    %140 = arith.index_cast %c9_i32 : i32 to index
    %c0_76 = arith.constant 0 : index
    %c0_77 = arith.constant 0 : index
    %141 = vector.load %arg15[%140, %c0_76, %c0_77] : memref<12x8x32xf32, #tpu.memory_space<vmem>>, vector<1x8x32xf32>
    %142 = vector.shape_cast %141 : vector<1x8x32xf32> to vector<8x32xf32>
    %143 = arith.addf %139, %142 : vector<8x32xf32>
    %144 = math.tanh %143 : vector<8x32xf32>
    %cst_78 = arith.constant dense<0.000000e+00> : vector<8x4xf32>
    %145 = tpu.matmul %144, %13, %cst_78 {dimension_numbers = #tpu.dot_dimension_numbers<[1], [0], [0], [1], [0, 0, 1, 1], [], []>} : vector<8x32xf32>, vector<32x4xf32>, vector<8x4xf32> -> vector<8x4xf32>
    %146 = arith.addf %145, %16 : vector<8x4xf32>
    %147 = arith.addf %134, %146 : vector<8x4xf32>
    %c10_i32 = arith.constant 10 : i32
    %148 = arith.index_cast %c10_i32 : i32 to index
    %c0_79 = arith.constant 0 : index
    %c0_80 = arith.constant 0 : index
    %149 = vector.load %arg16[%148, %c0_79, %c0_80] : memref<12x8x4xf32, #tpu.memory_space<vmem>>, vector<1x8x4xf32>
    %150 = vector.shape_cast %149 : vector<1x8x4xf32> to vector<8x4xf32>
    %151 = vector.shape_cast %147 : vector<8x4xf32> to vector<1x8x4xf32>
    tpu.vector_store %arg16[%148, %c0_79, %c0_80], %151 {strides = array<i32>} : memref<12x8x4xf32, #tpu.memory_space<vmem>>, vector<1x8x4xf32>,
    %cst_81 = arith.constant dense<0.000000e+00> : vector<8x32xf32>
    %152 = tpu.matmul %147, %12, %cst_81 {dimension_numbers = #tpu.dot_dimension_numbers<[1], [0], [0], [1], [0, 0, 1, 1], [], []>} : vector<8x4xf32>, vector<4x32xf32>, vector<8x32xf32> -> vector<8x32xf32>
    %153 = arith.index_cast %c10_i32 : i32 to index
    %c0_82 = arith.constant 0 : index
    %c0_83 = arith.constant 0 : index
    %154 = vector.load %arg15[%153, %c0_82, %c0_83] : memref<12x8x32xf32, #tpu.memory_space<vmem>>, vector<1x8x32xf32>
    %155 = vector.shape_cast %154 : vector<1x8x32xf32> to vector<8x32xf32>
    %156 = arith.addf %152, %155 : vector<8x32xf32>
    %157 = math.tanh %156 : vector<8x32xf32>
    %cst_84 = arith.constant dense<0.000000e+00> : vector<8x4xf32>
    %158 = tpu.matmul %157, %13, %cst_84 {dimension_numbers = #tpu.dot_dimension_numbers<[1], [0], [0], [1], [0, 0, 1, 1], [], []>} : vector<8x32xf32>, vector<32x4xf32>, vector<8x4xf32> -> vector<8x4xf32>
    %159 = arith.addf %158, %16 : vector<8x4xf32>
    %160 = arith.addf %147, %159 : vector<8x4xf32>
    %c11_i32 = arith.constant 11 : i32
    %161 = arith.index_cast %c11_i32 : i32 to index
    %c0_85 = arith.constant 0 : index
    %c0_86 = arith.constant 0 : index
    %162 = vector.load %arg16[%161, %c0_85, %c0_86] : memref<12x8x4xf32, #tpu.memory_space<vmem>>, vector<1x8x4xf32>
    %163 = vector.shape_cast %162 : vector<1x8x4xf32> to vector<8x4xf32>
    %164 = vector.shape_cast %160 : vector<8x4xf32> to vector<1x8x4xf32>
    tpu.vector_store %arg16[%161, %c0_85, %c0_86], %164 {strides = array<i32>} : memref<12x8x4xf32, #tpu.memory_space<vmem>>, vector<1x8x4xf32>,
    %cst_87 = arith.constant dense<0.000000e+00> : vector<8x32xf32>
    %165 = tpu.matmul %160, %12, %cst_87 {dimension_numbers = #tpu.dot_dimension_numbers<[1], [0], [0], [1], [0, 0, 1, 1], [], []>} : vector<8x4xf32>, vector<4x32xf32>, vector<8x32xf32> -> vector<8x32xf32>
    %166 = arith.index_cast %c11_i32 : i32 to index
    %c0_88 = arith.constant 0 : index
    %c0_89 = arith.constant 0 : index
    %167 = vector.load %arg15[%166, %c0_88, %c0_89] : memref<12x8x32xf32, #tpu.memory_space<vmem>>, vector<1x8x32xf32>
    %168 = vector.shape_cast %167 : vector<1x8x32xf32> to vector<8x32xf32>
    %169 = arith.addf %165, %168 : vector<8x32xf32>
    %170 = math.tanh %169 : vector<8x32xf32>
    %cst_90 = arith.constant dense<0.000000e+00> : vector<8x4xf32>
    %171 = tpu.matmul %170, %13, %cst_90 {dimension_numbers = #tpu.dot_dimension_numbers<[1], [0], [0], [1], [0, 0, 1, 1], [], []>} : vector<8x32xf32>, vector<32x4xf32>, vector<8x4xf32> -> vector<8x4xf32>
    %172 = arith.addf %171, %16 : vector<8x4xf32>
    %173 = arith.addf %160, %172 : vector<8x4xf32>
    %c12_i32 = arith.constant 12 : i32
    %c0_91 = arith.constant 0 : index
    %c0_92 = arith.constant 0 : index
    %174 = vector.load %arg14[%c0_91, %c0_92] : memref<8x4xf32, #tpu.memory_space<vmem>>, vector<8x4xf32>
    tpu.vector_store %arg14[%c0_91, %c0_92], %173 {strides = array<i32>} : memref<8x4xf32, #tpu.memory_space<vmem>>, vector<8x4xf32>,
    %c0_93 = arith.constant 0 : index
    %c0_94 = arith.constant 0 : index
    %c0_95 = arith.constant 0 : index
    %175 = vector.load %arg16[%c0_93, %c0_94, %c0_95] : memref<12x8x4xf32, #tpu.memory_space<vmem>>, vector<12x8x4xf32>
    %176 = vector.shape_cast %175 : vector<12x8x4xf32> to vector<96x4xf32>
    %c0_96 = arith.constant 0 : index
    %c0_97 = arith.constant 0 : index
    %177 = vector.load %arg9[%c0_96, %c0_97] : memref<4x16xf32, #tpu.memory_space<vmem>>, vector<4x16xf32>
    %cst_98 = arith.constant dense<0.000000e+00> : vector<96x16xf32>
    %178 = tpu.matmul %176, %177, %cst_98 {dimension_numbers = #tpu.dot_dimension_numbers<[1], [0], [0], [1], [0, 0, 1, 1], [], []>} : vector<96x4xf32>, vector<4x16xf32>, vector<96x16xf32> -> vector<96x16xf32>
    %c0_99 = arith.constant 0 : index
    %c0_100 = arith.constant 0 : index
    %179 = vector.load %arg10[%c0_99, %c0_100] : memref<1x16xf32, #tpu.memory_space<vmem>>, vector<1x16xf32>
    %180 = vector.broadcast %179 : vector<1x16xf32> to vector<96x16xf32>
    %181 = arith.addf %178, %180 : vector<96x16xf32>
    %182 = math.tanh %181 : vector<96x16xf32>
    %c0_101 = arith.constant 0 : index
    %c0_102 = arith.constant 0 : index
    %183 = vector.load %arg11[%c0_101, %c0_102] : memref<16x3xf32, #tpu.memory_space<vmem>>, vector<16x3xf32>
    %cst_103 = arith.constant dense<0.000000e+00> : vector<96x3xf32>
    %184 = tpu.matmul %182, %183, %cst_103 {dimension_numbers = #tpu.dot_dimension_numbers<[1], [0], [0], [1], [0, 0, 1, 1], [], []>} : vector<96x16xf32>, vector<16x3xf32>, vector<96x3xf32> -> vector<96x3xf32>
    %c0_104 = arith.constant 0 : index
    %c0_105 = arith.constant 0 : index
    %185 = vector.load %arg12[%c0_104, %c0_105] : memref<1x3xf32, #tpu.memory_space<vmem>>, vector<1x3xf32>
    %186 = vector.broadcast %185 : vector<1x3xf32> to vector<96x3xf32>
    %187 = arith.addf %184, %186 : vector<96x3xf32>
    %188 = vector.shape_cast %187 : vector<96x3xf32> to vector<12x8x3xf32>
    %c0_106 = arith.constant 0 : index
    %c0_107 = arith.constant 0 : index
    %c0_108 = arith.constant 0 : index
    %189 = vector.load %arg13[%c0_106, %c0_107, %c0_108] : memref<12x8x3xf32, #tpu.memory_space<vmem>>, vector<12x8x3xf32>
    tpu.vector_store %arg13[%c0_106, %c0_107, %c0_108], %188 {strides = array<i32>} : memref<12x8x3xf32, #tpu.memory_space<vmem>>, vector<12x8x3xf32>,
    return
  }
  func.func @transform_0(%arg0: i32, %arg1: i32) -> (i32, i32) {
    %c0_i32 = arith.constant 0 : i32
    %c0_i32_0 = arith.constant 0 : i32
    return %arg0, %c0_i32 : i32, i32
  }
  func.func @transform_1(%arg0: i32, %arg1: i32) -> (i32, i32, i32) {
    %c0_i32 = arith.constant 0 : i32
    %c0_i32_0 = arith.constant 0 : i32
    return %arg1, %arg0, %c0_i32 : i32, i32, i32
  }
  func.func @transform_2(%arg0: i32, %arg1: i32) -> (i32, i32) {
    %c0_i32 = arith.constant 0 : i32
    %c0_i32_0 = arith.constant 0 : i32
    %c0_i32_1 = arith.constant 0 : i32
    return %c0_i32, %c0_i32_0 : i32, i32
  }
  func.func @transform_3(%arg0: i32, %arg1: i32) -> (i32, i32) {
    %c0_i32 = arith.constant 0 : i32
    %c0_i32_0 = arith.constant 0 : i32
    %c0_i32_1 = arith.constant 0 : i32
    return %c0_i32, %c0_i32_0 : i32, i32
  }
  func.func @transform_4(%arg0: i32, %arg1: i32) -> (i32, i32) {
    %c0_i32 = arith.constant 0 : i32
    %c0_i32_0 = arith.constant 0 : i32
    %c0_i32_1 = arith.constant 0 : i32
    return %c0_i32, %c0_i32_0 : i32, i32
  }
  func.func @transform_5(%arg0: i32, %arg1: i32) -> (i32, i32) {
    %c0_i32 = arith.constant 0 : i32
    %c0_i32_0 = arith.constant 0 : i32
    %c0_i32_1 = arith.constant 0 : i32
    return %c0_i32, %c0_i32_0 : i32, i32
  }
  func.func @transform_6(%arg0: i32, %arg1: i32) -> (i32, i32) {
    %c0_i32 = arith.constant 0 : i32
    %c0_i32_0 = arith.constant 0 : i32
    %c0_i32_1 = arith.constant 0 : i32
    return %c0_i32, %c0_i32_0 : i32, i32
  }
  func.func @transform_7(%arg0: i32, %arg1: i32) -> (i32, i32) {
    %c0_i32 = arith.constant 0 : i32
    %c0_i32_0 = arith.constant 0 : i32
    %c0_i32_1 = arith.constant 0 : i32
    return %c0_i32, %c0_i32_0 : i32, i32
  }
  func.func @transform_8(%arg0: i32, %arg1: i32) -> (i32, i32) {
    %c0_i32 = arith.constant 0 : i32
    %c0_i32_0 = arith.constant 0 : i32
    %c0_i32_1 = arith.constant 0 : i32
    return %c0_i32, %c0_i32_0 : i32, i32
  }
  func.func @transform_9(%arg0: i32, %arg1: i32) -> (i32, i32) {
    %c0_i32 = arith.constant 0 : i32
    %c0_i32_0 = arith.constant 0 : i32
    %c0_i32_1 = arith.constant 0 : i32
    return %c0_i32, %c0_i32_0 : i32, i32
  }
  func.func @transform_10(%arg0: i32, %arg1: i32) -> (i32, i32) {
    %c0_i32 = arith.constant 0 : i32
    %c0_i32_0 = arith.constant 0 : i32
    %c0_i32_1 = arith.constant 0 : i32
    return %c0_i32, %c0_i32_0 : i32, i32
  }
  func.func @transform_11(%arg0: i32, %arg1: i32) -> (i32, i32, i32) {
    %c0_i32 = arith.constant 0 : i32
    %c0_i32_0 = arith.constant 0 : i32
    return %arg1, %arg0, %c0_i32 : i32, i32, i32
  }
}

</mosaic_0001>

<llo_original>
// kernel: tpu_custom_call.1
$region0: #{tpu_custom_call.1}
  #allocation0 [shape = 'u32[]', space=smem, size = 0x4, offset = 0x4, fixed_abs, tag = 'smem constant byte address 0x4 - core index']
  #allocation1 [shape = 'u32[144,128]{1,0:T(1,128)}', space=vmem, size = 0x12000, scoped, tag = 'internal scratch']
  #allocation2 [shape = 'f32[8,4]{1,0:T(8,128)}', space=vmem, size = 0x1000, scoped, tag = 'scratch operand']
  #allocation3 [shape = 'f32[12,8,32]{2,1,0:T(8,128)}', space=vmem, size = 0xc000, scoped, tag = 'scratch operand']
  #allocation4 [shape = 'f32[12,8,4]{2,1,0:T(8,128)}', space=vmem, size = 0xc000, scoped, tag = 'scratch operand']
  %s0 = inlined_call_operand.vmem [shape: f32[8,4], index: 0, kind: input, shape index: {}]
  %s1 = inlined_call_operand.vmem [shape: f32[12,8,2], index: 1, kind: input, shape index: {}]
  %s2 = inlined_call_operand.vmem [shape: f32[4,32], index: 2, kind: input, shape index: {}]
  %s3 = inlined_call_operand.vmem [shape: f32[2,32], index: 3, kind: input, shape index: {}]
  %s4 = inlined_call_operand.vmem [shape: f32[1,32], index: 4, kind: input, shape index: {}]
  %s5 = inlined_call_operand.vmem [shape: f32[32,4], index: 5, kind: input, shape index: {}]
  %s6 = inlined_call_operand.vmem [shape: f32[1,4], index: 6, kind: input, shape index: {}]
  %s7 = inlined_call_operand.vmem [shape: f32[4,16], index: 7, kind: input, shape index: {}]
  %s8 = inlined_call_operand.vmem [shape: f32[1,16], index: 8, kind: input, shape index: {}]
  %s9 = inlined_call_operand.vmem [shape: f32[16,3], index: 9, kind: input, shape index: {}]
  %s10 = inlined_call_operand.vmem [shape: f32[1,3], index: 10, kind: input, shape index: {}]
  %s11 = inlined_call_operand.vmem [shape: f32[12,8,3], index: 11, kind: output, shape index: {}]
  %s12 = sld [smem:[#allocation0]]
  $region58: #{tpu_custom_call.1} parent=0
    _
  %s14 = ssub.s32 1, %s12
  %s15 = scalar_select 0, %s14, %s12
  // Predicated region
  $region2: #{tpu_custom_call.1} parent=0 // pred_check
    _
  $region3: #{tpu_custom_call.1} parent=0 // pred_check_branch
    %17 = sbr.rel (0) target = $region5
  $region4: #{tpu_custom_call.1} parent=0 // pred_region
    _
  $region5: #{tpu_custom_call.1} parent=0 // pred_fallthru
    _
  // Predicated region
  $region6: #{tpu_custom_call.1} parent=0 // pred_check
    _
  $region7: #{tpu_custom_call.1} parent=0 // pred_check_branch
    %19 = sbr.rel (0) target = $region9
  $region8: #{tpu_custom_call.1} parent=0 // pred_region
    _
  $region9: #{tpu_custom_call.1} parent=0 // pred_fallthru
    _
  // Predicated region
  $region10: #{tpu_custom_call.1} parent=0 // pred_check
    _
  $region11: #{tpu_custom_call.1} parent=0 // pred_check_branch
    %21 = sbr.rel (0) target = $region13
  $region12: #{tpu_custom_call.1} parent=0 // pred_region
    _
  $region13: #{tpu_custom_call.1} parent=0 // pred_fallthru
    _
  // Predicated region
  $region14: #{tpu_custom_call.1} parent=0 // pred_check
    _
  $region15: #{tpu_custom_call.1} parent=0 // pred_check_branch
    %23 = sbr.rel (0) target = $region17
  $region16: #{tpu_custom_call.1} parent=0 // pred_region
    _
  $region17: #{tpu_custom_call.1} parent=0 // pred_fallthru
    _
  // Predicated region
  $region18: #{tpu_custom_call.1} parent=0 // pred_check
    _
  $region19: #{tpu_custom_call.1} parent=0 // pred_check_branch
    %25 = sbr.rel (0) target = $region21
  $region20: #{tpu_custom_call.1} parent=0 // pred_region
    _
  $region21: #{tpu_custom_call.1} parent=0 // pred_fallthru
    _
  // Predicated region
  $region22: #{tpu_custom_call.1} parent=0 // pred_check
    _
  $region23: #{tpu_custom_call.1} parent=0 // pred_check_branch
    %27 = sbr.rel (0) target = $region25
  $region24: #{tpu_custom_call.1} parent=0 // pred_region
    _
  $region25: #{tpu_custom_call.1} parent=0 // pred_fallthru
    _
  // Predicated region
  $region26: #{tpu_custom_call.1} parent=0 // pred_check
    _
  $region27: #{tpu_custom_call.1} parent=0 // pred_check_branch
    %29 = sbr.rel (0) target = $region29
  $region28: #{tpu_custom_call.1} parent=0 // pred_region
    _
  $region29: #{tpu_custom_call.1} parent=0 // pred_fallthru
    _
  // Predicated region
  $region30: #{tpu_custom_call.1} parent=0 // pred_check
    _
  $region31: #{tpu_custom_call.1} parent=0 // pred_check_branch
    %31 = sbr.rel (0) target = $region33
  $region32: #{tpu_custom_call.1} parent=0 // pred_region
    _
  $region33: #{tpu_custom_call.1} parent=0 // pred_fallthru
    _
  // Predicated region
  $region34: #{tpu_custom_call.1} parent=0 // pred_check
    _
  $region35: #{tpu_custom_call.1} parent=0 // pred_check_branch
    %33 = sbr.rel (0) target = $region37
  $region36: #{tpu_custom_call.1} parent=0 // pred_region
    _
  $region37: #{tpu_custom_call.1} parent=0 // pred_fallthru
    _
  // Predicated region
  $region38: #{tpu_custom_call.1} parent=0 // pred_check
    _
  $region39: #{tpu_custom_call.1} parent=0 // pred_check_branch
    %35 = sbr.rel (0) target = $region41
  $region40: #{tpu_custom_call.1} parent=0 // pred_region
    _
  $region41: #{tpu_custom_call.1} parent=0 // pred_fallthru
    _
  // Predicated region
  $region42: #{tpu_custom_call.1} parent=0 // pred_check
    _
  $region43: #{tpu_custom_call.1} parent=0 // pred_check_branch
    %37 = sbr.rel (0) target = $region45
  $region44: #{tpu_custom_call.1} parent=0 // pred_region
    _
  $region45: #{tpu_custom_call.1} parent=0 // pred_fallthru
    _
  %p38 = scmp.eq.s32.totalorder 0, 0
  // Predicated region
  $region46: #{tpu_custom_call.1} parent=0 // pred_check
    %p39 = pneg %p38
  $region47: #{tpu_custom_call.1} parent=0 // pred_check_branch
    %41 = sbr.rel (%p39) target = $region49
  $region48: #{tpu_custom_call.1} parent=0 // pred_region
    %v42 = vld [vmem:[%s0] sm:$0xff]
    %vm43 = vcmask 31744
    %44 = vst.msk [vmem:[#allocation2] sm:$0xff] %vm43, %v42
  $region49: #{tpu_custom_call.1} parent=0 // pred_fallthru
    _
  %v45 = vld [vmem:[%s1] sm:$0xff]
  %v46 = vld [vmem:[%s1 + $0x8] sm:$0xff]
  %v47 = vld [vmem:[%s1 + $0x10] sm:$0xff]
  %v48 = vld [vmem:[%s1 + $0x18] sm:$0xff]
  %v49 = vld [vmem:[%s1 + $0x20] sm:$0xff]
  %v50 = vld [vmem:[%s1 + $0x28] sm:$0xff]
  %v51 = vld [vmem:[%s1 + $0x30] sm:$0xff]
  %v52 = vld [vmem:[%s1 + $0x38] sm:$0xff]
  %v53 = vld [vmem:[%s1 + $0x40] sm:$0xff]
  %v54 = vld [vmem:[%s1 + $0x48] sm:$0xff]
  %v55 = vld [vmem:[%s1 + $0x50] sm:$0xff]
  %v56 = vld [vmem:[%s1 + $0x58] sm:$0xff]
  %v57 = vld [vmem:[%s3] sm:$0x3]
  %v58 = vld [vmem:[%s4] sm:$0x1]
  %v60 = vlaneseq
  %v61 = vshrl.u32 %v60, 7
  %v62 = vsub.s32 0, %v61
  %v63 = vrot.slane %v58, %v62
  %vm65 = vcmask 15360
  %v67 = vsel %vm65, %v45, 0
  %v70 = vsel %vm65, %v46, 0
  %v73 = vsel %vm65, %v47, 0
  %v76 = vsel %vm65, %v48, 0
  %v79 = vsel %vm65, %v49, 0
  %v82 = vsel %vm65, %v50, 0
  %v85 = vsel %vm65, %v51, 0
  %v88 = vsel %vm65, %v52, 0
  %v91 = vsel %vm65, %v53, 0
  %v94 = vsel %vm65, %v54, 0
  %v97 = vsel %vm65, %v55, 0
  %v100 = vsel %vm65, %v56, 0
  %vm102 = vcmask 1041408
  %v104 = vsel %vm102, %v57, 0
  %106 = vmatprep.subr.mxu0 0.0
  %107 = vmatpush1.msra.mxu0 %v104
  %108 = vmatprep.subr.mxu0 0.0
  %109 = vmatpush1.msra.mxu0 0.0
  %110 = vmatprep.subr.mxu0 0.0
  %111 = vmatpush1.msra.mxu0 0.0
  %112 = vmatprep.subr.mxu0 0.0
  %113 = vmatpush1.msra.mxu0 0.0
  %114 = vmatprep.subr.mxu0 0.0
  %115 = vmatpush1.msra.mxu0 0.0
  %116 = vmatprep.subr.mxu0 0.0
  %117 = vmatpush1.msra.mxu0 0.0
  %118 = vmatprep.subr.mxu0 0.0
  %119 = vmatpush1.msra.mxu0 0.0
  %120 = vmatprep.subr.mxu0 0.0
  %121 = vmatpush1.msra.mxu0 0.0
  %122 = vmatprep.subr.mxu0 0.0
  %123 = vmatpush1.msra.mxu0 0.0
  %124 = vmatprep.subr.mxu0 0.0
  %125 = vmatpush1.msra.mxu0 0.0
  %126 = vmatprep.subr.mxu0 0.0
  %127 = vmatpush1.msra.mxu0 0.0
  %128 = vmatprep.subr.mxu0 0.0
  %129 = vmatpush1.msra.mxu0 0.0
  %130 = vmatprep.subr.mxu0 0.0
  %131 = vmatpush1.msra.mxu0 0.0
  %132 = vmatprep.subr.mxu0 0.0
  %133 = vmatpush1.msra.mxu0 0.0
  %134 = vmatprep.subr.mxu0 0.0
  %135 = vmatpush1.msra.mxu0 0.0
  %136 = vmatprep.subr.mxu0 0.0
  %137 = vmatpush1.msra.mxu0 0.0
  %138 = vmatprep.subr.mxu0 0.0
  %139 = vmatpush1.msra.mxu0 0.0
  %140 = vmatprep.subr.mxu0 0.0
  %141 = vmatpush1.msra.mxu0 0.0
  %142 = vmatprep.subr.mxu0 0.0
  %143 = vmatpush1.msra.mxu0 0.0
  %144 = vmatprep.subr.mxu0 0.0
  %145 = vmatpush1.msra.mxu0 0.0
  %146 = vmatprep.subr.mxu0 0.0
  %147 = vmatpush1.msra.mxu0 0.0
  %148 = vmatprep.subr.mxu0 0.0
  %149 = vmatpush1.msra.mxu0 0.0
  %150 = vmatprep.subr.mxu0 0.0
  %151 = vmatpush1.msra.mxu0 0.0
  %152 = vmatprep.subr.mxu0 0.0
  %153 = vmatpush1.msra.mxu0 0.0
  %154 = vmatprep.subr.mxu0 0.0
  %155 = vmatpush1.msra.mxu0 0.0
  %156 = vmatprep.subr.mxu0 0.0
  %157 = vmatpush1.msra.mxu0 0.0
  %158 = vmatprep.subr.mxu0 0.0
  %159 = vmatpush1.msra.mxu0 0.0
  %160 = vmatprep.subr.mxu0 0.0
  %161 = vmatpush1.msra.mxu0 0.0
  %162 = vmatprep.subr.mxu0 0.0
  %163 = vmatpush1.msra.mxu0 0.0
  %164 = vmatprep.subr.mxu0 0.0
  %165 = vmatpush1.msra.mxu0 0.0
  %166 = vmatprep.subr.mxu0 0.0
  %167 = vmatpush1.msra.mxu0 0.0
  %168 = vmatprep.subr.mxu0 0.0
  %169 = vmatpush1.msra.mxu0 0.0
  %170 = vmatprep.mubr.f32.mxu0 0.0
  %171 = vmatmul.mubr.f32.gmra.mrb[0].mxu0 %v67
  %v172 = vpop.f32.mrb[0].mxu0
  %v173 = vadd.f32 %v63, %v172
  %v174 = vpop.f32.mrb[0].mxu0
  %175 = vmatprep.mubr.f32.mxu0 0.0
  %176 = vmatmul.mubr.f32.gmra.mrb[0].mxu0 %v70
  %v177 = vpop.f32.mrb[0].mxu0
  %v178 = vadd.f32 %v63, %v177
  %v179 = vpop.f32.mrb[0].mxu0
  %180 = vmatprep.mubr.f32.mxu0 0.0
  %181 = vmatmul.mubr.f32.gmra.mrb[0].mxu0 %v73
  %v182 = vpop.f32.mrb[0].mxu0
  %v183 = vadd.f32 %v63, %v182
  %v184 = vpop.f32.mrb[0].mxu0
  %185 = vmatprep.mubr.f32.mxu0 0.0
  %186 = vmatmul.mubr.f32.gmra.mrb[0].mxu0 %v76
  %v187 = vpop.f32.mrb[0].mxu0
  %v188 = vadd.f32 %v63, %v187
  %v189 = vpop.f32.mrb[0].mxu0
  %190 = vmatprep.mubr.f32.mxu0 0.0
  %191 = vmatmul.mubr.f32.gmra.mrb[0].mxu0 %v79
  %v192 = vpop.f32.mrb[0].mxu0
  %v193 = vadd.f32 %v63, %v192
  %v194 = vpop.f32.mrb[0].mxu0
  %195 = vmatprep.mubr.f32.mxu0 0.0
  %196 = vmatmul.mubr.f32.gmra.mrb[0].mxu0 %v82
  %v197 = vpop.f32.mrb[0].mxu0
  %v198 = vadd.f32 %v63, %v197
  %v199 = vpop.f32.mrb[0].mxu0
  %200 = vmatprep.mubr.f32.mxu0 0.0
  %201 = vmatmul.mubr.f32.gmra.mrb[0].mxu0 %v85
  %v202 = vpop.f32.mrb[0].mxu0
  %v203 = vadd.f32 %v63, %v202
  %v204 = vpop.f32.mrb[0].mxu0
  %205 = vmatprep.mubr.f32.mxu0 0.0
  %206 = vmatmul.mubr.f32.gmra.mrb[0].mxu0 %v88
  %v207 = vpop.f32.mrb[0].mxu0
  %v208 = vadd.f32 %v63, %v207
  %v209 = vpop.f32.mrb[0].mxu0
  %210 = vmatprep.mubr.f32.mxu0 0.0
  %211 = vmatmul.mubr.f32.gmra.mrb[0].mxu0 %v91
  %v212 = vpop.f32.mrb[0].mxu0
  %v213 = vadd.f32 %v63, %v212
  %v214 = vpop.f32.mrb[0].mxu0
  %215 = vmatprep.mubr.f32.mxu0 0.0
  %216 = vmatmul.mubr.f32.gmra.mrb[0].mxu0 %v94
  %v217 = vpop.f32.mrb[0].mxu0
  %v218 = vadd.f32 %v63, %v217
  %v219 = vpop.f32.mrb[0].mxu0
  %220 = vmatprep.mubr.f32.mxu0 0.0
  %221 = vmatmul.mubr.f32.gmra.mrb[0].mxu0 %v97
  %v222 = vpop.f32.mrb[0].mxu0
  %v223 = vadd.f32 %v63, %v222
  %v224 = vpop.f32.mrb[0].mxu0
  %225 = vmatprep.mubr.f32.mxu0 0.0
  %226 = vmatmul.mubr.f32.gmra.mrb[0].mxu0 %v100
  %v227 = vpop.f32.mrb[0].mxu0
  %v228 = vadd.f32 %v63, %v227
  %v229 = vpop.f32.mrb[0].mxu0
  %230 = vdwg.mxu0
  %vm231 = vcmask 261120
  %232 = vst.msk [vmem:[#allocation3] sm:$0xff] %vm231, %v173
  %233 = vst.msk [vmem:[#allocation3 + $0x8] sm:$0xff] %vm231, %v178
  %234 = vst.msk [vmem:[#allocation3 + $0x10] sm:$0xff] %vm231, %v183
  %235 = vst.msk [vmem:[#allocation3 + $0x18] sm:$0xff] %vm231, %v188
  %236 = vst.msk [vmem:[#allocation3 + $0x20] sm:$0xff] %vm231, %v193
  %237 = vst.msk [vmem:[#allocation3 + $0x28] sm:$0xff] %vm231, %v198
  %238 = vst.msk [vmem:[#allocation3 + $0x30] sm:$0xff] %vm231, %v203
  %239 = vst.msk [vmem:[#allocation3 + $0x38] sm:$0xff] %vm231, %v208
  %240 = vst.msk [vmem:[#allocation3 + $0x40] sm:$0xff] %vm231, %v213
  %241 = vst.msk [vmem:[#allocation3 + $0x48] sm:$0xff] %vm231, %v218
  %242 = vst.msk [vmem:[#allocation3 + $0x50] sm:$0xff] %vm231, %v223
  %243 = vst.msk [vmem:[#allocation3 + $0x58] sm:$0xff] %vm231, %v228
  %v244 = vld [vmem:[%s2] sm:$0xf]
  %v245 = vld [vmem:[%s5] sm:$0xff]
  %v246 = vld [vmem:[%s5 + $0x8] sm:$0xff]
  %v247 = vld [vmem:[%s5 + $0x10] sm:$0xff]
  %v248 = vld [vmem:[%s5 + $0x18] sm:$0xff]
  %v249 = vld [vmem:[%s6] sm:$0x1]
  %v251 = vlaneseq
  %v252 = vshrl.u32 %v251, 7
  %v253 = vsub.s32 0, %v252
  %v254 = vrot.slane %v249, %v253
  %v256 = vld [vmem:[#allocation2] sm:$0xff]
  %vm257 = vcmask 31744
  %258 = vst.msk [vmem:[#allocation4] sm:$0xff] %vm257, %v256
  %v259 = vld [vmem:[#allocation3] sm:$0xff]
  %v261 = vsel %vm257, %v256, 0
  %vm263 = vcmask 1043456
  %v265 = vsel %vm263, %v244, 0
  %267 = vmatprep.subr.mxu0 0.0
  %268 = vmatpush1.msra.mxu0 %v265
  %269 = vmatprep.subr.mxu0 0.0
  %270 = vmatpush1.msra.mxu0 0.0
  %271 = vmatprep.subr.mxu0 0.0
  %272 = vmatpush1.msra.mxu0 0.0
  %273 = vmatprep.subr.mxu0 0.0
  %274 = vmatpush1.msra.mxu0 0.0
  %275 = vmatprep.subr.mxu0 0.0
  %276 = vmatpush1.msra.mxu0 0.0
  %277 = vmatprep.subr.mxu0 0.0
  %278 = vmatpush1.msra.mxu0 0.0
  %279 = vmatprep.subr.mxu0 0.0
  %280 = vmatpush1.msra.mxu0 0.0
  %281 = vmatprep.subr.mxu0 0.0
  %282 = vmatpush1.msra.mxu0 0.0
  %283 = vmatprep.subr.mxu0 0.0
  %284 = vmatpush1.msra.mxu0 0.0
  %285 = vmatprep.subr.mxu0 0.0
  %286 = vmatpush1.msra.mxu0 0.0
  %287 = vmatprep.subr.mxu0 0.0
  %288 = vmatpush1.msra.mxu0 0.0
  %289 = vmatprep.subr.mxu0 0.0
  %290 = vmatpush1.msra.mxu0 0.0
  %291 = vmatprep.subr.mxu0 0.0
  %292 = vmatpush1.msra.mxu0 0.0
  %293 = vmatprep.subr.mxu0 0.0
  %294 = vmatpush1.msra.mxu0 0.0
  %295 = vmatprep.subr.mxu0 0.0
  %296 = vmatpush1.msra.mxu0 0.0
  %297 = vmatprep.subr.mxu0 0.0
  %298 = vmatpush1.msra.mxu0 0.0
  %299 = vmatprep.subr.mxu0 0.0
  %300 = vmatpush1.msra.mxu0 0.0
  %301 = vmatprep.subr.mxu0 0.0
  %302 = vmatpush1.msra.mxu0 0.0
  %303 = vmatprep.subr.mxu0 0.0
  %304 = vmatpush1.msra.mxu0 0.0
  %305 = vmatprep.subr.mxu0 0.0
  %306 = vmatpush1.msra.mxu0 0.0
  %307 = vmatprep.subr.mxu0 0.0
  %308 = vmatpush1.msra.mxu0 0.0
  %309 = vmatprep.subr.mxu0 0.0
  %310 = vmatpush1.msra.mxu0 0.0
  %311 = vmatprep.subr.mxu0 0.0
  %312 = vmatpush1.msra.mxu0 0.0
  %313 = vmatprep.subr.mxu0 0.0
  %314 = vmatpush1.msra.mxu0 0.0
  %315 = vmatprep.subr.mxu0 0.0
  %316 = vmatpush1.msra.mxu0 0.0
  %317 = vmatprep.subr.mxu0 0.0
  %318 = vmatpush1.msra.mxu0 0.0
  %319 = vmatprep.subr.mxu0 0.0
  %320 = vmatpush1.msra.mxu0 0.0
  %321 = vmatprep.subr.mxu0 0.0
  %322 = vmatpush1.msra.mxu0 0.0
  %323 = vmatprep.subr.mxu0 0.0
  %324 = vmatpush1.msra.mxu0 0.0
  %325 = vmatprep.subr.mxu0 0.0
  %326 = vmatpush1.msra.mxu0 0.0
  %327 = vmatprep.subr.mxu0 0.0
  %328 = vmatpush1.msra.mxu0 0.0
  %329 = vmatprep.subr.mxu0 0.0
  %330 = vmatpush1.msra.mxu0 0.0
  %331 = vmatprep.mubr.f32.mxu0 0.0
  %332 = vmatmul.mubr.f32.gmra.mrb[0].mxu0 %v261
  %v333 = vpop.f32.mrb[0].mxu0
  %v334 = vadd.f32 %v259, %v333
  %v335 = vpop.f32.mrb[0].mxu0
  %336 = vdwg.mxu0
  %v337 = vtanh.pop %v334
  %v339 = vsel %vm231, %v337, 0
  %341 = vmatprep.subr.mxu0 0.0
  %342 = vmatpush1.msra.mxu0 %v245
  %343 = vmatprep.subr.mxu0 0.0
  %344 = vmatpush1.msra.mxu0 %v246
  %345 = vmatprep.subr.mxu0 0.0
  %346 = vmatpush1.msra.mxu0 %v247
  %347 = vmatprep.subr.mxu0 0.0
  %348 = vmatpush1.msra.mxu0 %v248
  %349 = vmatprep.subr.mxu0 0.0
  %350 = vmatpush1.msra.mxu0 0.0
  %351 = vmatprep.subr.mxu0 0.0
  %352 = vmatpush1.msra.mxu0 0.0
  %353 = vmatprep.subr.mxu0 0.0
  %354 = vmatpush1.msra.mxu0 0.0
  %355 = vmatprep.subr.mxu0 0.0
  %356 = vmatpush1.msra.mxu0 0.0
  %357 = vmatprep.subr.mxu0 0.0
  %358 = vmatpush1.msra.mxu0 0.0
  %359 = vmatprep.subr.mxu0 0.0
  %360 = vmatpush1.msra.mxu0 0.0
  %361 = vmatprep.subr.mxu0 0.0
  %362 = vmatpush1.msra.mxu0 0.0
  %363 = vmatprep.subr.mxu0 0.0
  %364 = vmatpush1.msra.mxu0 0.0
  %365 = vmatprep.subr.mxu0 0.0
  %366 = vmatpush1.msra.mxu0 0.0
  %367 = vmatprep.subr.mxu0 0.0
  %368 = vmatpush1.msra.mxu0 0.0
  %369 = vmatprep.subr.mxu0 0.0
  %370 = vmatpush1.msra.mxu0 0.0
  %371 = vmatprep.subr.mxu0 0.0
  %372 = vmatpush1.msra.mxu0 0.0
  %373 = vmatprep.subr.mxu0 0.0
  %374 = vmatpush1.msra.mxu0 0.0
  %375 = vmatprep.subr.mxu0 0.0
  %376 = vmatpush1.msra.mxu0 0.0
  %377 = vmatprep.subr.mxu0 0.0
  %378 = vmatpush1.msra.mxu0 0.0
  %379 = vmatprep.subr.mxu0 0.0
  %380 = vmatpush1.msra.mxu0 0.0
  %381 = vmatprep.subr.mxu0 0.0
  %382 = vmatpush1.msra.mxu0 0.0
  %383 = vmatprep.subr.mxu0 0.0
  %384 = vmatpush1.msra.mxu0 0.0
  %385 = vmatprep.subr.mxu0 0.0
  %386 = vmatpush1.msra.mxu0 0.0
  %387 = vmatprep.subr.mxu0 0.0
  %388 = vmatpush1.msra.mxu0 0.0
  %389 = vmatprep.subr.mxu0 0.0
  %390 = vmatpush1.msra.mxu0 0.0
  %391 = vmatprep.subr.mxu0 0.0
  %392 = vmatpush1.msra.mxu0 0.0
  %393 = vmatprep.subr.mxu0 0.0
  %394 = vmatpush1.msra.mxu0 0.0
  %395 = vmatprep.subr.mxu0 0.0
  %396 = vmatpush1.msra.mxu0 0.0
  %397 = vmatprep.subr.mxu0 0.0
  %398 = vmatpush1.msra.mxu0 0.0
  %399 = vmatprep.subr.mxu0 0.0
  %400 = vmatpush1.msra.mxu0 0.0
  %401 = vmatprep.subr.mxu0 0.0
  %402 = vmatpush1.msra.mxu0 0.0
  %403 = vmatprep.subr.mxu0 0.0
  %404 = vmatpush1.msra.mxu0 0.0
  %405 = vmatprep.mubr.f32.mxu0 0.0
  %406 = vmatmul.mubr.f32.gmra.mrb[0].mxu0 %v339
  %v407 = vpop.f32.mrb[0].mxu0
  %v408 = vadd.f32 %v254, %v407
  %v409 = vpop.f32.mrb[0].mxu0
  %410 = vdwg.mxu0
  %v411 = vadd.f32 %v256, %v408
  %s412 = scalar_lea.vmem [#allocation4], 8
  %413 = vst.msk [vmem:[%s412] sm:$0xff] %vm257, %v411
  %s414 = scalar_lea.vmem [#allocation3], 8
  %v415 = vld [vmem:[%s414] sm:$0xff]
  %v417 = vsel %vm257, %v411, 0
  %419 = vmatprep.subr.mxu0 0.0
  %420 = vmatpush1.msra.mxu0 %v265
  %421 = vmatprep.subr.mxu0 0.0
  %422 = vmatpush1.msra.mxu0 0.0
  %423 = vmatprep.subr.mxu0 0.0
  %424 = vmatpush1.msra.mxu0 0.0
  %425 = vmatprep.subr.mxu0 0.0
  %426 = vmatpush1.msra.mxu0 0.0
  %427 = vmatprep.subr.mxu0 0.0
  %428 = vmatpush1.msra.mxu0 0.0
  %429 = vmatprep.subr.mxu0 0.0
  %430 = vmatpush1.msra.mxu0 0.0
  %431 = vmatprep.subr.mxu0 0.0
  %432 = vmatpush1.msra.mxu0 0.0
  %433 = vmatprep.subr.mxu0 0.0
  %434 = vmatpush1.msra.mxu0 0.0
  %435 = vmatprep.subr.mxu0 0.0
  %436 = vmatpush1.msra.mxu0 0.0
  %437 = vmatprep.subr.mxu0 0.0
  %438 = vmatpush1.msra.mxu0 0.0
  %439 = vmatprep.subr.mxu0 0.0
  %440 = vmatpush1.msra.mxu0 0.0
  %441 = vmatprep.subr.mxu0 0.0
  %442 = vmatpush1.msra.mxu0 0.0
  %443 = vmatprep.subr.mxu0 0.0
  %444 = vmatpush1.msra.mxu0 0.0
  %445 = vmatprep.subr.mxu0 0.0
  %446 = vmatpush1.msra.mxu0 0.0
  %447 = vmatprep.subr.mxu0 0.0
  %448 = vmatpush1.msra.mxu0 0.0
  %449 = vmatprep.subr.mxu0 0.0
  %450 = vmatpush1.msra.mxu0 0.0
  %451 = vmatprep.subr.mxu0 0.0
  %452 = vmatpush1.msra.mxu0 0.0
  %453 = vmatprep.subr.mxu0 0.0
  %454 = vmatpush1.msra.mxu0 0.0
  %455 = vmatprep.subr.mxu0 0.0
  %456 = vmatpush1.msra.mxu0 0.0
  %457 = vmatprep.subr.mxu0 0.0
  %458 = vmatpush1.msra.mxu0 0.0
  %459 = vmatprep.subr.mxu0 0.0
  %460 = vmatpush1.msra.mxu0 0.0
  %461 = vmatprep.subr.mxu0 0.0
  %462 = vmatpush1.msra.mxu0 0.0
  %463 = vmatprep.subr.mxu0 0.0
  %464 = vmatpush1.msra.mxu0 0.0
  %465 = vmatprep.subr.mxu0 0.0
  %466 = vmatpush1.msra.mxu0 0.0
  %467 = vmatprep.subr.mxu0 0.0
  %468 = vmatpush1.msra.mxu0 0.0
  %469 = vmatprep.subr.mxu0 0.0
  %470 = vmatpush1.msra.mxu0 0.0
  %471 = vmatprep.subr.mxu0 0.0
  %472 = vmatpush1.msra.mxu0 0.0
  %473 = vmatprep.subr.mxu0 0.0
  %474 = vmatpush1.msra.mxu0 0.0
  %475 = vmatprep.subr.mxu0 0.0
  %476 = vmatpush1.msra.mxu0 0.0
  %477 = vmatprep.subr.mxu0 0.0
  %478 = vmatpush1.msra.mxu0 0.0
  %479 = vmatprep.subr.mxu0 0.0
  %480 = vmatpush1.msra.mxu0 0.0
  %481 = vmatprep.subr.mxu0 0.0
  %482 = vmatpush1.msra.mxu0 0.0
  %483 = vmatprep.mubr.f32.mxu0 0.0
  %484 = vmatmul.mubr.f32.gmra.mrb[0].mxu0 %v417
  %v485 = vpop.f32.mrb[0].mxu0
  %v486 = vadd.f32 %v415, %v485
  %v487 = vpop.f32.mrb[0].mxu0
  %488 = vdwg.mxu0
  %v489 = vtanh.pop %v486
  %v491 = vsel %vm231, %v489, 0
  %493 = vmatprep.subr.mxu0 0.0
  %494 = vmatpush1.msra.mxu0 %v245
  %495 = vmatprep.subr.mxu0 0.0
  %496 = vmatpush1.msra.mxu0 %v246
  %497 = vmatprep.subr.mxu0 0.0
  %498 = vmatpush1.msra.mxu0 %v247
  %499 = vmatprep.subr.mxu0 0.0
  %500 = vmatpush1.msra.mxu0 %v248
  %501 = vmatprep.subr.mxu0 0.0
  %502 = vmatpush1.msra.mxu0 0.0
  %503 = vmatprep.subr.mxu0 0.0
  %504 = vmatpush1.msra.mxu0 0.0
  %505 = vmatprep.subr.mxu0 0.0
  %506 = vmatpush1.msra.mxu0 0.0
  %507 = vmatprep.subr.mxu0 0.0
  %508 = vmatpush1.msra.mxu0 0.0
  %509 = vmatprep.subr.mxu0 0.0
  %510 = vmatpush1.msra.mxu0 0.0
  %511 = vmatprep.subr.mxu0 0.0
  %512 = vmatpush1.msra.mxu0 0.0
  %513 = vmatprep.subr.mxu0 0.0
  %514 = vmatpush1.msra.mxu0 0.0
  %515 = vmatprep.subr.mxu0 0.0
  %516 = vmatpush1.msra.mxu0 0.0
  %517 = vmatprep.subr.mxu0 0.0
  %518 = vmatpush1.msra.mxu0 0.0
  %519 = vmatprep.subr.mxu0 0.0
  %520 = vmatpush1.msra.mxu0 0.0
  %521 = vmatprep.subr.mxu0 0.0
  %522 = vmatpush1.msra.mxu0 0.0
  %523 = vmatprep.subr.mxu0 0.0
  %524 = vmatpush1.msra.mxu0 0.0
  %525 = vmatprep.subr.mxu0 0.0
  %526 = vmatpush1.msra.mxu0 0.0
  %527 = vmatprep.subr.mxu0 0.0
  %528 = vmatpush1.msra.mxu0 0.0
  %529 = vmatprep.subr.mxu0 0.0
  %530 = vmatpush1.msra.mxu0 0.0
  %531 = vmatprep.subr.mxu0 0.0
  %532 = vmatpush1.msra.mxu0 0.0
  %533 = vmatprep.subr.mxu0 0.0
  %534 = vmatpush1.msra.mxu0 0.0
  %535 = vmatprep.subr.mxu0 0.0
  %536 = vmatpush1.msra.mxu0 0.0
  %537 = vmatprep.subr.mxu0 0.0
  %538 = vmatpush1.msra.mxu0 0.0
  %539 = vmatprep.subr.mxu0 0.0
  %540 = vmatpush1.msra.mxu0 0.0
  %541 = vmatprep.subr.mxu0 0.0
  %542 = vmatpush1.msra.mxu0 0.0
  %543 = vmatprep.subr.mxu0 0.0
  %544 = vmatpush1.msra.mxu0 0.0
  %545 = vmatprep.subr.mxu0 0.0
  %546 = vmatpush1.msra.mxu0 0.0
  %547 = vmatprep.subr.mxu0 0.0
  %548 = vmatpush1.msra.mxu0 0.0
  %549 = vmatprep.subr.mxu0 0.0
  %550 = vmatpush1.msra.mxu0 0.0
  %551 = vmatprep.subr.mxu0 0.0
  %552 = vmatpush1.msra.mxu0 0.0
  %553 = vmatprep.subr.mxu0 0.0
  %554 = vmatpush1.msra.mxu0 0.0
  %555 = vmatprep.subr.mxu0 0.0
  %556 = vmatpush1.msra.mxu0 0.0
  %557 = vmatprep.mubr.f32.mxu0 0.0
  %558 = vmatmul.mubr.f32.gmra.mrb[0].mxu0 %v491
  %v559 = vpop.f32.mrb[0].mxu0
  %v560 = vadd.f32 %v254, %v559
  %v561 = vpop.f32.mrb[0].mxu0
  %562 = vdwg.mxu0
  %v563 = vadd.f32 %v411, %v560
  %s564 = scalar_lea.vmem [#allocation4], 16
  %565 = vst.msk [vmem:[%s564] sm:$0xff] %vm257, %v563
  %s566 = scalar_lea.vmem [#allocation3], 16
  %v567 = vld [vmem:[%s566] sm:$0xff]
  %v569 = vsel %vm257, %v563, 0
  %571 = vmatprep.subr.mxu0 0.0
  %572 = vmatpush1.msra.mxu0 %v265
  %573 = vmatprep.subr.mxu0 0.0
  %574 = vmatpush1.msra.mxu0 0.0
  %575 = vmatprep.subr.mxu0 0.0
  %576 = vmatpush1.msra.mxu0 0.0
  %577 = vmatprep.subr.mxu0 0.0
  %578 = vmatpush1.msra.mxu0 0.0
  %579 = vmatprep.subr.mxu0 0.0
  %580 = vmatpush1.msra.mxu0 0.0
  %581 = vmatprep.subr.mxu0 0.0
  %582 = vmatpush1.msra.mxu0 0.0
  %583 = vmatprep.subr.mxu0 0.0
  %584 = vmatpush1.msra.mxu0 0.0
  %585 = vmatprep.subr.mxu0 0.0
  %586 = vmatpush1.msra.mxu0 0.0
  %587 = vmatprep.subr.mxu0 0.0
  %588 = vmatpush1.msra.mxu0 0.0
  %589 = vmatprep.subr.mxu0 0.0
  %590 = vmatpush1.msra.mxu0 0.0
  %591 = vmatprep.subr.mxu0 0.0
  %592 = vmatpush1.msra.mxu0 0.0
  %593 = vmatprep.subr.mxu0 0.0
  %594 = vmatpush1.msra.mxu0 0.0
  %595 = vmatprep.subr.mxu0 0.0
  %596 = vmatpush1.msra.mxu0 0.0
  %597 = vmatprep.subr.mxu0 0.0
  %598 = vmatpush1.msra.mxu0 0.0
  %599 = vmatprep.subr.mxu0 0.0
  %600 = vmatpush1.msra.mxu0 0.0
  %601 = vmatprep.subr.mxu0 0.0
  %602 = vmatpush1.msra.mxu0 0.0
  %603 = vmatprep.subr.mxu0 0.0
  %604 = vmatpush1.msra.mxu0 0.0
  %605 = vmatprep.subr.mxu0 0.0
  %606 = vmatpush1.msra.mxu0 0.0
  %607 = vmatprep.subr.mxu0 0.0
  %608 = vmatpush1.msra.mxu0 0.0
  %609 = vmatprep.subr.mxu0 0.0
  %610 = vmatpush1.msra.mxu0 0.0
  %611 = vmatprep.subr.mxu0 0.0
  %612 = vmatpush1.msra.mxu0 0.0
  %613 = vmatprep.subr.mxu0 0.0
  %614 = vmatpush1.msra.mxu0 0.0
  %615 = vmatprep.subr.mxu0 0.0
  %616 = vmatpush1.msra.mxu0 0.0
  %617 = vmatprep.subr.mxu0 0.0
  %618 = vmatpush1.msra.mxu0 0.0
  %619 = vmatprep.subr.mxu0 0.0
  %620 = vmatpush1.msra.mxu0 0.0
  %621 = vmatprep.subr.mxu0 0.0
  %622 = vmatpush1.msra.mxu0 0.0
  %623 = vmatprep.subr.mxu0 0.0
  %624 = vmatpush1.msra.mxu0 0.0
  %625 = vmatprep.subr.mxu0 0.0
  %626 = vmatpush1.msra.mxu0 0.0
  %627 = vmatprep.subr.mxu0 0.0
  %628 = vmatpush1.msra.mxu0 0.0
  %629 = vmatprep.subr.mxu0 0.0
  %630 = vmatpush1.msra.mxu0 0.0
  %631 = vmatprep.subr.mxu0 0.0
  %632 = vmatpush1.msra.mxu0 0.0
  %633 = vmatprep.subr.mxu0 0.0
  %634 = vmatpush1.msra.mxu0 0.0
  %635 = vmatprep.mubr.f32.mxu0 0.0
  %636 = vmatmul.mubr.f32.gmra.mrb[0].mxu0 %v569
  %v637 = vpop.f32.mrb[0].mxu0
  %v638 = vadd.f32 %v567, %v637
  %v639 = vpop.f32.mrb[0].mxu0
  %640 = vdwg.mxu0
  %v641 = vtanh.pop %v638
  %v643 = vsel %vm231, %v641, 0
  %645 = vmatprep.subr.mxu0 0.0
  %646 = vmatpush1.msra.mxu0 %v245
  %647 = vmatprep.subr.mxu0 0.0
  %648 = vmatpush1.msra.mxu0 %v246
  %649 = vmatprep.subr.mxu0 0.0
  %650 = vmatpush1.msra.mxu0 %v247
  %651 = vmatprep.subr.mxu0 0.0
  %652 = vmatpush1.msra.mxu0 %v248
  %653 = vmatprep.subr.mxu0 0.0
  %654 = vmatpush1.msra.mxu0 0.0
  %655 = vmatprep.subr.mxu0 0.0
  %656 = vmatpush1.msra.mxu0 0.0
  %657 = vmatprep.subr.mxu0 0.0
  %658 = vmatpush1.msra.mxu0 0.0
  %659 = vmatprep.subr.mxu0 0.0
  %660 = vmatpush1.msra.mxu0 0.0
  %661 = vmatprep.subr.mxu0 0.0
  %662 = vmatpush1.msra.mxu0 0.0
  %663 = vmatprep.subr.mxu0 0.0
  %664 = vmatpush1.msra.mxu0 0.0
  %665 = vmatprep.subr.mxu0 0.0
  %666 = vmatpush1.msra.mxu0 0.0
  %667 = vmatprep.subr.mxu0 0.0
  %668 = vmatpush1.msra.mxu0 0.0
  %669 = vmatprep.subr.mxu0 0.0
  %670 = vmatpush1.msra.mxu0 0.0
  %671 = vmatprep.subr.mxu0 0.0
  %672 = vmatpush1.msra.mxu0 0.0
  %673 = vmatprep.subr.mxu0 0.0
  %674 = vmatpush1.msra.mxu0 0.0
  %675 = vmatprep.subr.mxu0 0.0
  %676 = vmatpush1.msra.mxu0 0.0
  %677 = vmatprep.subr.mxu0 0.0
  %678 = vmatpush1.msra.mxu0 0.0
  %679 = vmatprep.subr.mxu0 0.0
  %680 = vmatpush1.msra.mxu0 0.0
  %681 = vmatprep.subr.mxu0 0.0
  %682 = vmatpush1.msra.mxu0 0.0
  %683 = vmatprep.subr.mxu0 0.0
  %684 = vmatpush1.msra.mxu0 0.0
  %685 = vmatprep.subr.mxu0 0.0
  %686 = vmatpush1.msra.mxu0 0.0
  %687 = vmatprep.subr.mxu0 0.0
  %688 = vmatpush1.msra.mxu0 0.0
  %689 = vmatprep.subr.mxu0 0.0
  %690 = vmatpush1.msra.mxu0 0.0
  %691 = vmatprep.subr.mxu0 0.0
  %692 = vmatpush1.msra.mxu0 0.0
  %693 = vmatprep.subr.mxu0 0.0
  %694 = vmatpush1.msra.mxu0 0.0
  %695 = vmatprep.subr.mxu0 0.0
  %696 = vmatpush1.msra.mxu0 0.0
  %697 = vmatprep.subr.mxu0 0.0
  %698 = vmatpush1.msra.mxu0 0.0
  %699 = vmatprep.subr.mxu0 0.0
  %700 = vmatpush1.msra.mxu0 0.0
  %701 = vmatprep.subr.mxu0 0.0
  %702 = vmatpush1.msra.mxu0 0.0
  %703 = vmatprep.subr.mxu0 0.0
  %704 = vmatpush1.msra.mxu0 0.0
  %705 = vmatprep.subr.mxu0 0.0
  %706 = vmatpush1.msra.mxu0 0.0
  %707 = vmatprep.subr.mxu0 0.0
  %708 = vmatpush1.msra.mxu0 0.0
  %709 = vmatprep.mubr.f32.mxu0 0.0
  %710 = vmatmul.mubr.f32.gmra.mrb[0].mxu0 %v643
  %v711 = vpop.f32.mrb[0].mxu0
  %v712 = vadd.f32 %v254, %v711
  %v713 = vpop.f32.mrb[0].mxu0
  %714 = vdwg.mxu0
  %v715 = vadd.f32 %v563, %v712
  %s716 = scalar_lea.vmem [#allocation4], 24
  %717 = vst.msk [vmem:[%s716] sm:$0xff] %vm257, %v715
  %s718 = scalar_lea.vmem [#allocation3], 24
  %v719 = vld [vmem:[%s718] sm:$0xff]
  %v721 = vsel %vm257, %v715, 0
  %723 = vmatprep.subr.mxu0 0.0
  %724 = vmatpush1.msra.mxu0 %v265
  %725 = vmatprep.subr.mxu0 0.0
  %726 = vmatpush1.msra.mxu0 0.0
  %727 = vmatprep.subr.mxu0 0.0
  %728 = vmatpush1.msra.mxu0 0.0
  %729 = vmatprep.subr.mxu0 0.0
  %730 = vmatpush1.msra.mxu0 0.0
  %731 = vmatprep.subr.mxu0 0.0
  %732 = vmatpush1.msra.mxu0 0.0
  %733 = vmatprep.subr.mxu0 0.0
  %734 = vmatpush1.msra.mxu0 0.0
  %735 = vmatprep.subr.mxu0 0.0
  %736 = vmatpush1.msra.mxu0 0.0
  %737 = vmatprep.subr.mxu0 0.0
  %738 = vmatpush1.msra.mxu0 0.0
  %739 = vmatprep.subr.mxu0 0.0
  %740 = vmatpush1.msra.mxu0 0.0
  %741 = vmatprep.subr.mxu0 0.0
  %742 = vmatpush1.msra.mxu0 0.0
  %743 = vmatprep.subr.mxu0 0.0
  %744 = vmatpush1.msra.mxu0 0.0
  %745 = vmatprep.subr.mxu0 0.0
  %746 = vmatpush1.msra.mxu0 0.0
  %747 = vmatprep.subr.mxu0 0.0
  %748 = vmatpush1.msra.mxu0 0.0
  %749 = vmatprep.subr.mxu0 0.0
  %750 = vmatpush1.msra.mxu0 0.0
  %751 = vmatprep.subr.mxu0 0.0
  %752 = vmatpush1.msra.mxu0 0.0
  %753 = vmatprep.subr.mxu0 0.0
  %754 = vmatpush1.msra.mxu0 0.0
  %755 = vmatprep.subr.mxu0 0.0
  %756 = vmatpush1.msra.mxu0 0.0
  %757 = vmatprep.subr.mxu0 0.0
  %758 = vmatpush1.msra.mxu0 0.0
  %759 = vmatprep.subr.mxu0 0.0
  %760 = vmatpush1.msra.mxu0 0.0
  %761 = vmatprep.subr.mxu0 0.0
  %762 = vmatpush1.msra.mxu0 0.0
  %763 = vmatprep.subr.mxu0 0.0
  %764 = vmatpush1.msra.mxu0 0.0
  %765 = vmatprep.subr.mxu0 0.0
  %766 = vmatpush1.msra.mxu0 0.0
  %767 = vmatprep.subr.mxu0 0.0
  %768 = vmatpush1.msra.mxu0 0.0
  %769 = vmatprep.subr.mxu0 0.0
  %770 = vmatpush1.msra.mxu0 0.0
  %771 = vmatprep.subr.mxu0 0.0
  %772 = vmatpush1.msra.mxu0 0.0
  %773 = vmatprep.subr.mxu0 0.0
  %774 = vmatpush1.msra.mxu0 0.0
  %775 = vmatprep.subr.mxu0 0.0
  %776 = vmatpush1.msra.mxu0 0.0
  %777 = vmatprep.subr.mxu0 0.0
  %778 = vmatpush1.msra.mxu0 0.0
  %779 = vmatprep.subr.mxu0 0.0
  %780 = vmatpush1.msra.mxu0 0.0
  %781 = vmatprep.subr.mxu0 0.0
  %782 = vmatpush1.msra.mxu0 0.0
  %783 = vmatprep.subr.mxu0 0.0
  %784 = vmatpush1.msra.mxu0 0.0
  %785 = vmatprep.subr.mxu0 0.0
  %786 = vmatpush1.msra.mxu0 0.0
  %787 = vmatprep.mubr.f32.mxu0 0.0
  %788 = vmatmul.mubr.f32.gmra.mrb[0].mxu0 %v721
  %v789 = vpop.f32.mrb[0].mxu0
  %v790 = vadd.f32 %v719, %v789
  %v791 = vpop.f32.mrb[0].mxu0
  %792 = vdwg.mxu0
  %v793 = vtanh.pop %v790
  %v795 = vsel %vm231, %v793, 0
  %797 = vmatprep.subr.mxu0 0.0
  %798 = vmatpush1.msra.mxu0 %v245
  %799 = vmatprep.subr.mxu0 0.0
  %800 = vmatpush1.msra.mxu0 %v246
  %801 = vmatprep.subr.mxu0 0.0
  %802 = vmatpush1.msra.mxu0 %v247
  %803 = vmatprep.subr.mxu0 0.0
  %804 = vmatpush1.msra.mxu0 %v248
  %805 = vmatprep.subr.mxu0 0.0
  %806 = vmatpush1.msra.mxu0 0.0
  %807 = vmatprep.subr.mxu0 0.0
  %808 = vmatpush1.msra.mxu0 0.0
  %809 = vmatprep.subr.mxu0 0.0
  %810 = vmatpush1.msra.mxu0 0.0
  %811 = vmatprep.subr.mxu0 0.0
  %812 = vmatpush1.msra.mxu0 0.0
  %813 = vmatprep.subr.mxu0 0.0
  %814 = vmatpush1.msra.mxu0 0.0
  %815 = vmatprep.subr.mxu0 0.0
  %816 = vmatpush1.msra.mxu0 0.0
  %817 = vmatprep.subr.mxu0 0.0
  %818 = vmatpush1.msra.mxu0 0.0
  %819 = vmatprep.subr.mxu0 0.0
  %820 = vmatpush1.msra.mxu0 0.0
  %821 = vmatprep.subr.mxu0 0.0
  %822 = vmatpush1.msra.mxu0 0.0
  %823 = vmatprep.subr.mxu0 0.0
  %824 = vmatpush1.msra.mxu0 0.0
  %825 = vmatprep.subr.mxu0 0.0
  %826 = vmatpush1.msra.mxu0 0.0
  %827 = vmatprep.subr.mxu0 0.0
  %828 = vmatpush1.msra.mxu0 0.0
  %829 = vmatprep.subr.mxu0 0.0
  %830 = vmatpush1.msra.mxu0 0.0
  %831 = vmatprep.subr.mxu0 0.0
  %832 = vmatpush1.msra.mxu0 0.0
  %833 = vmatprep.subr.mxu0 0.0
  %834 = vmatpush1.msra.mxu0 0.0
  %835 = vmatprep.subr.mxu0 0.0
  %836 = vmatpush1.msra.mxu0 0.0
  %837 = vmatprep.subr.mxu0 0.0
  %838 = vmatpush1.msra.mxu0 0.0
  %839 = vmatprep.subr.mxu0 0.0
  %840 = vmatpush1.msra.mxu0 0.0
  %841 = vmatprep.subr.mxu0 0.0
  %842 = vmatpush1.msra.mxu0 0.0
  %843 = vmatprep.subr.mxu0 0.0
  %844 = vmatpush1.msra.mxu0 0.0
  %845 = vmatprep.subr.mxu0 0.0
  %846 = vmatpush1.msra.mxu0 0.0
  %847 = vmatprep.subr.mxu0 0.0
  %848 = vmatpush1.msra.mxu0 0.0
  %849 = vmatprep.subr.mxu0 0.0
  %850 = vmatpush1.msra.mxu0 0.0
  %851 = vmatprep.subr.mxu0 0.0
  %852 = vmatpush1.msra.mxu0 0.0
  %853 = vmatprep.subr.mxu0 0.0
  %854 = vmatpush1.msra.mxu0 0.0
  %855 = vmatprep.subr.mxu0 0.0
  %856 = vmatpush1.msra.mxu0 0.0
  %857 = vmatprep.subr.mxu0 0.0
  %858 = vmatpush1.msra.mxu0 0.0
  %859 = vmatprep.subr.mxu0 0.0
  %860 = vmatpush1.msra.mxu0 0.0
  %861 = vmatprep.mubr.f32.mxu0 0.0
  %862 = vmatmul.mubr.f32.gmra.mrb[0].mxu0 %v795
  %v863 = vpop.f32.mrb[0].mxu0
  %v864 = vadd.f32 %v254, %v863
  %v865 = vpop.f32.mrb[0].mxu0
  %866 = vdwg.mxu0
  %v867 = vadd.f32 %v715, %v864
  %s868 = scalar_lea.vmem [#allocation4], 32
  %869 = vst.msk [vmem:[%s868] sm:$0xff] %vm257, %v867
  %s870 = scalar_lea.vmem [#allocation3], 32
  %v871 = vld [vmem:[%s870] sm:$0xff]
  %v873 = vsel %vm257, %v867, 0
  %875 = vmatprep.subr.mxu0 0.0
  %876 = vmatpush1.msra.mxu0 %v265
  %877 = vmatprep.subr.mxu0 0.0
  %878 = vmatpush1.msra.mxu0 0.0
  %879 = vmatprep.subr.mxu0 0.0
  %880 = vmatpush1.msra.mxu0 0.0
  %881 = vmatprep.subr.mxu0 0.0
  %882 = vmatpush1.msra.mxu0 0.0
  %883 = vmatprep.subr.mxu0 0.0
  %884 = vmatpush1.msra.mxu0 0.0
  %885 = vmatprep.subr.mxu0 0.0
  %886 = vmatpush1.msra.mxu0 0.0
  %887 = vmatprep.subr.mxu0 0.0
  %888 = vmatpush1.msra.mxu0 0.0
  %889 = vmatprep.subr.mxu0 0.0
  %890 = vmatpush1.msra.mxu0 0.0
  %891 = vmatprep.subr.mxu0 0.0
  %892 = vmatpush1.msra.mxu0 0.0
  %893 = vmatprep.subr.mxu0 0.0
  %894 = vmatpush1.msra.mxu0 0.0
  %895 = vmatprep.subr.mxu0 0.0
  %896 = vmatpush1.msra.mxu0 0.0
  %897 = vmatprep.subr.mxu0 0.0
  %898 = vmatpush1.msra.mxu0 0.0
  %899 = vmatprep.subr.mxu0 0.0
  %900 = vmatpush1.msra.mxu0 0.0
  %901 = vmatprep.subr.mxu0 0.0
  %902 = vmatpush1.msra.mxu0 0.0
  %903 = vmatprep.subr.mxu0 0.0
  %904 = vmatpush1.msra.mxu0 0.0
  %905 = vmatprep.subr.mxu0 0.0
  %906 = vmatpush1.msra.mxu0 0.0
  %907 = vmatprep.subr.mxu0 0.0
  %908 = vmatpush1.msra.mxu0 0.0
  %909 = vmatprep.subr.mxu0 0.0
  %910 = vmatpush1.msra.mxu0 0.0
  %911 = vmatprep.subr.mxu0 0.0
  %912 = vmatpush1.msra.mxu0 0.0
  %913 = vmatprep.subr.mxu0 0.0
  %914 = vmatpush1.msra.mxu0 0.0
  %915 = vmatprep.subr.mxu0 0.0
  %916 = vmatpush1.msra.mxu0 0.0
  %917 = vmatprep.subr.mxu0 0.0
  %918 = vmatpush1.msra.mxu0 0.0
  %919 = vmatprep.subr.mxu0 0.0
  %920 = vmatpush1.msra.mxu0 0.0
  %921 = vmatprep.subr.mxu0 0.0
  %922 = vmatpush1.msra.mxu0 0.0
  %923 = vmatprep.subr.mxu0 0.0
  %924 = vmatpush1.msra.mxu0 0.0
  %925 = vmatprep.subr.mxu0 0.0
  %926 = vmatpush1.msra.mxu0 0.0
  %927 = vmatprep.subr.mxu0 0.0
  %928 = vmatpush1.msra.mxu0 0.0
  %929 = vmatprep.subr.mxu0 0.0
  %930 = vmatpush1.msra.mxu0 0.0
  %931 = vmatprep.subr.mxu0 0.0
  %932 = vmatpush1.msra.mxu0 0.0
  %933 = vmatprep.subr.mxu0 0.0
  %934 = vmatpush1.msra.mxu0 0.0
  %935 = vmatprep.subr.mxu0 0.0
  %936 = vmatpush1.msra.mxu0 0.0
  %937 = vmatprep.subr.mxu0 0.0
  %938 = vmatpush1.msra.mxu0 0.0
  %939 = vmatprep.mubr.f32.mxu0 0.0
  %940 = vmatmul.mubr.f32.gmra.mrb[0].mxu0 %v873
  %v941 = vpop.f32.mrb[0].mxu0
  %v942 = vadd.f32 %v871, %v941
  %v943 = vpop.f32.mrb[0].mxu0
  %944 = vdwg.mxu0
  %v945 = vtanh.pop %v942
  %v947 = vsel %vm231, %v945, 0
  %949 = vmatprep.subr.mxu0 0.0
  %950 = vmatpush1.msra.mxu0 %v245
  %951 = vmatprep.subr.mxu0 0.0
  %952 = vmatpush1.msra.mxu0 %v246
  %953 = vmatprep.subr.mxu0 0.0
  %954 = vmatpush1.msra.mxu0 %v247
  %955 = vmatprep.subr.mxu0 0.0
  %956 = vmatpush1.msra.mxu0 %v248
  %957 = vmatprep.subr.mxu0 0.0
  %958 = vmatpush1.msra.mxu0 0.0
  %959 = vmatprep.subr.mxu0 0.0
  %960 = vmatpush1.msra.mxu0 0.0
  %961 = vmatprep.subr.mxu0 0.0
  %962 = vmatpush1.msra.mxu0 0.0
  %963 = vmatprep.subr.mxu0 0.0
  %964 = vmatpush1.msra.mxu0 0.0
  %965 = vmatprep.subr.mxu0 0.0
  %966 = vmatpush1.msra.mxu0 0.0
  %967 = vmatprep.subr.mxu0 0.0
  %968 = vmatpush1.msra.mxu0 0.0
  %969 = vmatprep.subr.mxu0 0.0
  %970 = vmatpush1.msra.mxu0 0.0
  %971 = vmatprep.subr.mxu0 0.0
  %972 = vmatpush1.msra.mxu0 0.0
  %973 = vmatprep.subr.mxu0 0.0
  %974 = vmatpush1.msra.mxu0 0.0
  %975 = vmatprep.subr.mxu0 0.0
  %976 = vmatpush1.msra.mxu0 0.0
  %977 = vmatprep.subr.mxu0 0.0
  %978 = vmatpush1.msra.mxu0 0.0
  %979 = vmatprep.subr.mxu0 0.0
  %980 = vmatpush1.msra.mxu0 0.0
  %981 = vmatprep.subr.mxu0 0.0
  %982 = vmatpush1.msra.mxu0 0.0
  %983 = vmatprep.subr.mxu0 0.0
  %984 = vmatpush1.msra.mxu0 0.0
  %985 = vmatprep.subr.mxu0 0.0
  %986 = vmatpush1.msra.mxu0 0.0
  %987 = vmatprep.subr.mxu0 0.0
  %988 = vmatpush1.msra.mxu0 0.0
  %989 = vmatprep.subr.mxu0 0.0
  %990 = vmatpush1.msra.mxu0 0.0
  %991 = vmatprep.subr.mxu0 0.0
  %992 = vmatpush1.msra.mxu0 0.0
  %993 = vmatprep.subr.mxu0 0.0
  %994 = vmatpush1.msra.mxu0 0.0
  %995 = vmatprep.subr.mxu0 0.0
  %996 = vmatpush1.msra.mxu0 0.0
  %997 = vmatprep.subr.mxu0 0.0
  %998 = vmatpush1.msra.mxu0 0.0
  %999 = vmatprep.subr.mxu0 0.0
  %1000 = vmatpush1.msra.mxu0 0.0
  %1001 = vmatprep.subr.mxu0 0.0
  %1002 = vmatpush1.msra.mxu0 0.0
  %1003 = vmatprep.subr.mxu0 0.0
  %1004 = vmatpush1.msra.mxu0 0.0
  %1005 = vmatprep.subr.mxu0 0.0
  %1006 = vmatpush1.msra.mxu0 0.0
  %1007 = vmatprep.subr.mxu0 0.0
  %1008 = vmatpush1.msra.mxu0 0.0
  %1009 = vmatprep.subr.mxu0 0.0
  %1010 = vmatpush1.msra.mxu0 0.0
  %1011 = vmatprep.subr.mxu0 0.0
  %1012 = vmatpush1.msra.mxu0 0.0
  %1013 = vmatprep.mubr.f32.mxu0 0.0
  %1014 = vmatmul.mubr.f32.gmra.mrb[0].mxu0 %v947
  %v1015 = vpop.f32.mrb[0].mxu0
  %v1016 = vadd.f32 %v254, %v1015
  %v1017 = vpop.f32.mrb[0].mxu0
  %1018 = vdwg.mxu0
  %v1019 = vadd.f32 %v867, %v1016
  %s1020 = scalar_lea.vmem [#allocation4], 40
  %1021 = vst.msk [vmem:[%s1020] sm:$0xff] %vm257, %v1019
  %s1022 = scalar_lea.vmem [#allocation3], 40
  %v1023 = vld [vmem:[%s1022] sm:$0xff]
  %v1025 = vsel %vm257, %v1019, 0
  %1027 = vmatprep.subr.mxu0 0.0
  %1028 = vmatpush1.msra.mxu0 %v265
  %1029 = vmatprep.subr.mxu0 0.0
  %1030 = vmatpush1.msra.mxu0 0.0
  %1031 = vmatprep.subr.mxu0 0.0
  %1032 = vmatpush1.msra.mxu0 0.0
  %1033 = vmatprep.subr.mxu0 0.0
  %1034 = vmatpush1.msra.mxu0 0.0
  %1035 = vmatprep.subr.mxu0 0.0
  %1036 = vmatpush1.msra.mxu0 0.0
  %1037 = vmatprep.subr.mxu0 0.0
  %1038 = vmatpush1.msra.mxu0 0.0
  %1039 = vmatprep.subr.mxu0 0.0
  %1040 = vmatpush1.msra.mxu0 0.0
  %1041 = vmatprep.subr.mxu0 0.0
  %1042 = vmatpush1.msra.mxu0 0.0
  %1043 = vmatprep.subr.mxu0 0.0
  %1044 = vmatpush1.msra.mxu0 0.0
  %1045 = vmatprep.subr.mxu0 0.0
  %1046 = vmatpush1.msra.mxu0 0.0
  %1047 = vmatprep.subr.mxu0 0.0
  %1048 = vmatpush1.msra.mxu0 0.0
  %1049 = vmatprep.subr.mxu0 0.0
  %1050 = vmatpush1.msra.mxu0 0.0
  %1051 = vmatprep.subr.mxu0 0.0
  %1052 = vmatpush1.msra.mxu0 0.0
  %1053 = vmatprep.subr.mxu0 0.0
  %1054 = vmatpush1.msra.mxu0 0.0
  %1055 = vmatprep.subr.mxu0 0.0
  %1056 = vmatpush1.msra.mxu0 0.0
  %1057 = vmatprep.subr.mxu0 0.0
  %1058 = vmatpush1.msra.mxu0 0.0
  %1059 = vmatprep.subr.mxu0 0.0
  %1060 = vmatpush1.msra.mxu0 0.0
  %1061 = vmatprep.subr.mxu0 0.0
  %1062 = vmatpush1.msra.mxu0 0.0
  %1063 = vmatprep.subr.mxu0 0.0
  %1064 = vmatpush1.msra.mxu0 0.0
  %1065 = vmatprep.subr.mxu0 0.0
  %1066 = vmatpush1.msra.mxu0 0.0
  %1067 = vmatprep.subr.mxu0 0.0
  %1068 = vmatpush1.msra.mxu0 0.0
  %1069 = vmatprep.subr.mxu0 0.0
  %1070 = vmatpush1.msra.mxu0 0.0
  %1071 = vmatprep.subr.mxu0 0.0
  %1072 = vmatpush1.msra.mxu0 0.0
  %1073 = vmatprep.subr.mxu0 0.0
  %1074 = vmatpush1.msra.mxu0 0.0
  %1075 = vmatprep.subr.mxu0 0.0
  %1076 = vmatpush1.msra.mxu0 0.0
  %1077 = vmatprep.subr.mxu0 0.0
  %1078 = vmatpush1.msra.mxu0 0.0
  %1079 = vmatprep.subr.mxu0 0.0
  %1080 = vmatpush1.msra.mxu0 0.0
  %1081 = vmatprep.subr.mxu0 0.0
  %1082 = vmatpush1.msra.mxu0 0.0
  %1083 = vmatprep.subr.mxu0 0.0
  %1084 = vmatpush1.msra.mxu0 0.0
  %1085 = vmatprep.subr.mxu0 0.0
  %1086 = vmatpush1.msra.mxu0 0.0
  %1087 = vmatprep.subr.mxu0 0.0
  %1088 = vmatpush1.msra.mxu0 0.0
  %1089 = vmatprep.subr.mxu0 0.0
  %1090 = vmatpush1.msra.mxu0 0.0
  %1091 = vmatprep.mubr.f32.mxu0 0.0
  %1092 = vmatmul.mubr.f32.gmra.mrb[0].mxu0 %v1025
  %v1093 = vpop.f32.mrb[0].mxu0
  %v1094 = vadd.f32 %v1023, %v1093
  %v1095 = vpop.f32.mrb[0].mxu0
  %1096 = vdwg.mxu0
  %v1097 = vtanh.pop %v1094
  %v1099 = vsel %vm231, %v1097, 0
  %1101 = vmatprep.subr.mxu0 0.0
  %1102 = vmatpush1.msra.mxu0 %v245
  %1103 = vmatprep.subr.mxu0 0.0
  %1104 = vmatpush1.msra.mxu0 %v246
  %1105 = vmatprep.subr.mxu0 0.0
  %1106 = vmatpush1.msra.mxu0 %v247
  %1107 = vmatprep.subr.mxu0 0.0
  %1108 = vmatpush1.msra.mxu0 %v248
  %1109 = vmatprep.subr.mxu0 0.0
  %1110 = vmatpush1.msra.mxu0 0.0
  %1111 = vmatprep.subr.mxu0 0.0
  %1112 = vmatpush1.msra.mxu0 0.0
  %1113 = vmatprep.subr.mxu0 0.0
  %1114 = vmatpush1.msra.mxu0 0.0
  %1115 = vmatprep.subr.mxu0 0.0
  %1116 = vmatpush1.msra.mxu0 0.0
  %1117 = vmatprep.subr.mxu0 0.0
  %1118 = vmatpush1.msra.mxu0 0.0
  %1119 = vmatprep.subr.mxu0 0.0
  %1120 = vmatpush1.msra.mxu0 0.0
  %1121 = vmatprep.subr.mxu0 0.0
  %1122 = vmatpush1.msra.mxu0 0.0
  %1123 = vmatprep.subr.mxu0 0.0
  %1124 = vmatpush1.msra.mxu0 0.0
  %1125 = vmatprep.subr.mxu0 0.0
  %1126 = vmatpush1.msra.mxu0 0.0
  %1127 = vmatprep.subr.mxu0 0.0
  %1128 = vmatpush1.msra.mxu0 0.0
  %1129 = vmatprep.subr.mxu0 0.0
  %1130 = vmatpush1.msra.mxu0 0.0
  %1131 = vmatprep.subr.mxu0 0.0
  %1132 = vmatpush1.msra.mxu0 0.0
  %1133 = vmatprep.subr.mxu0 0.0
  %1134 = vmatpush1.msra.mxu0 0.0
  %1135 = vmatprep.subr.mxu0 0.0
  %1136 = vmatpush1.msra.mxu0 0.0
  %1137 = vmatprep.subr.mxu0 0.0
  %1138 = vmatpush1.msra.mxu0 0.0
  %1139 = vmatprep.subr.mxu0 0.0
  %1140 = vmatpush1.msra.mxu0 0.0
  %1141 = vmatprep.subr.mxu0 0.0
  %1142 = vmatpush1.msra.mxu0 0.0
  %1143 = vmatprep.subr.mxu0 0.0
  %1144 = vmatpush1.msra.mxu0 0.0
  %1145 = vmatprep.subr.mxu0 0.0
  %1146 = vmatpush1.msra.mxu0 0.0
  %1147 = vmatprep.subr.mxu0 0.0
  %1148 = vmatpush1.msra.mxu0 0.0
  %1149 = vmatprep.subr.mxu0 0.0
  %1150 = vmatpush1.msra.mxu0 0.0
  %1151 = vmatprep.subr.mxu0 0.0
  %1152 = vmatpush1.msra.mxu0 0.0
  %1153 = vmatprep.subr.mxu0 0.0
  %1154 = vmatpush1.msra.mxu0 0.0
  %1155 = vmatprep.subr.mxu0 0.0
  %1156 = vmatpush1.msra.mxu0 0.0
  %1157 = vmatprep.subr.mxu0 0.0
  %1158 = vmatpush1.msra.mxu0 0.0
  %1159 = vmatprep.subr.mxu0 0.0
  %1160 = vmatpush1.msra.mxu0 0.0
  %1161 = vmatprep.subr.mxu0 0.0
  %1162 = vmatpush1.msra.mxu0 0.0
  %1163 = vmatprep.subr.mxu0 0.0
  %1164 = vmatpush1.msra.mxu0 0.0
  %1165 = vmatprep.mubr.f32.mxu0 0.0
  %1166 = vmatmul.mubr.f32.gmra.mrb[0].mxu0 %v1099
  %v1167 = vpop.f32.mrb[0].mxu0
  %v1168 = vadd.f32 %v254, %v1167
  %v1169 = vpop.f32.mrb[0].mxu0
  %1170 = vdwg.mxu0
  %v1171 = vadd.f32 %v1019, %v1168
  %s1172 = scalar_lea.vmem [#allocation4], 48
  %1173 = vst.msk [vmem:[%s1172] sm:$0xff] %vm257, %v1171
  %s1174 = scalar_lea.vmem [#allocation3], 48
  %v1175 = vld [vmem:[%s1174] sm:$0xff]
  %v1177 = vsel %vm257, %v1171, 0
  %1179 = vmatprep.subr.mxu0 0.0
  %1180 = vmatpush1.msra.mxu0 %v265
  %1181 = vmatprep.subr.mxu0 0.0
  %1182 = vmatpush1.msra.mxu0 0.0
  %1183 = vmatprep.subr.mxu0 0.0
  %1184 = vmatpush1.msra.mxu0 0.0
  %1185 = vmatprep.subr.mxu0 0.0
  %1186 = vmatpush1.msra.mxu0 0.0
  %1187 = vmatprep.subr.mxu0 0.0
  %1188 = vmatpush1.msra.mxu0 0.0
  %1189 = vmatprep.subr.mxu0 0.0
  %1190 = vmatpush1.msra.mxu0 0.0
  %1191 = vmatprep.subr.mxu0 0.0
  %1192 = vmatpush1.msra.mxu0 0.0
  %1193 = vmatprep.subr.mxu0 0.0
  %1194 = vmatpush1.msra.mxu0 0.0
  %1195 = vmatprep.subr.mxu0 0.0
  %1196 = vmatpush1.msra.mxu0 0.0
  %1197 = vmatprep.subr.mxu0 0.0
  %1198 = vmatpush1.msra.mxu0 0.0
  %1199 = vmatprep.subr.mxu0 0.0
  %1200 = vmatpush1.msra.mxu0 0.0
  %1201 = vmatprep.subr.mxu0 0.0
  %1202 = vmatpush1.msra.mxu0 0.0
  %1203 = vmatprep.subr.mxu0 0.0
  %1204 = vmatpush1.msra.mxu0 0.0
  %1205 = vmatprep.subr.mxu0 0.0
  %1206 = vmatpush1.msra.mxu0 0.0
  %1207 = vmatprep.subr.mxu0 0.0
  %1208 = vmatpush1.msra.mxu0 0.0
  %1209 = vmatprep.subr.mxu0 0.0
  %1210 = vmatpush1.msra.mxu0 0.0
  %1211 = vmatprep.subr.mxu0 0.0
  %1212 = vmatpush1.msra.mxu0 0.0
  %1213 = vmatprep.subr.mxu0 0.0
  %1214 = vmatpush1.msra.mxu0 0.0
  %1215 = vmatprep.subr.mxu0 0.0
  %1216 = vmatpush1.msra.mxu0 0.0
  %1217 = vmatprep.subr.mxu0 0.0
  %1218 = vmatpush1.msra.mxu0 0.0
  %1219 = vmatprep.subr.mxu0 0.0
  %1220 = vmatpush1.msra.mxu0 0.0
  %1221 = vmatprep.subr.mxu0 0.0
  %1222 = vmatpush1.msra.mxu0 0.0
  %1223 = vmatprep.subr.mxu0 0.0
  %1224 = vmatpush1.msra.mxu0 0.0
  %1225 = vmatprep.subr.mxu0 0.0
  %1226 = vmatpush1.msra.mxu0 0.0
  %1227 = vmatprep.subr.mxu0 0.0
  %1228 = vmatpush1.msra.mxu0 0.0
  %1229 = vmatprep.subr.mxu0 0.0
  %1230 = vmatpush1.msra.mxu0 0.0
  %1231 = vmatprep.subr.mxu0 0.0
  %1232 = vmatpush1.msra.mxu0 0.0
  %1233 = vmatprep.subr.mxu0 0.0
  %1234 = vmatpush1.msra.mxu0 0.0
  %1235 = vmatprep.subr.mxu0 0.0
  %1236 = vmatpush1.msra.mxu0 0.0
  %1237 = vmatprep.subr.mxu0 0.0
  %1238 = vmatpush1.msra.mxu0 0.0
  %1239 = vmatprep.subr.mxu0 0.0
  %1240 = vmatpush1.msra.mxu0 0.0
  %1241 = vmatprep.subr.mxu0 0.0
  %1242 = vmatpush1.msra.mxu0 0.0
  %1243 = vmatprep.mubr.f32.mxu0 0.0
  %1244 = vmatmul.mubr.f32.gmra.mrb[0].mxu0 %v1177
  %v1245 = vpop.f32.mrb[0].mxu0
  %v1246 = vadd.f32 %v1175, %v1245
  %v1247 = vpop.f32.mrb[0].mxu0
  %1248 = vdwg.mxu0
  %v1249 = vtanh.pop %v1246
  %v1251 = vsel %vm231, %v1249, 0
  %1253 = vmatprep.subr.mxu0 0.0
  %1254 = vmatpush1.msra.mxu0 %v245
  %1255 = vmatprep.subr.mxu0 0.0
  %1256 = vmatpush1.msra.mxu0 %v246
  %1257 = vmatprep.subr.mxu0 0.0
  %1258 = vmatpush1.msra.mxu0 %v247
  %1259 = vmatprep.subr.mxu0 0.0
  %1260 = vmatpush1.msra.mxu0 %v248
  %1261 = vmatprep.subr.mxu0 0.0
  %1262 = vmatpush1.msra.mxu0 0.0
  %1263 = vmatprep.subr.mxu0 0.0
  %1264 = vmatpush1.msra.mxu0 0.0
  %1265 = vmatprep.subr.mxu0 0.0
  %1266 = vmatpush1.msra.mxu0 0.0
  %1267 = vmatprep.subr.mxu0 0.0
  %1268 = vmatpush1.msra.mxu0 0.0
  %1269 = vmatprep.subr.mxu0 0.0
  %1270 = vmatpush1.msra.mxu0 0.0
  %1271 = vmatprep.subr.mxu0 0.0
  %1272 = vmatpush1.msra.mxu0 0.0
  %1273 = vmatprep.subr.mxu0 0.0
  %1274 = vmatpush1.msra.mxu0 0.0
  %1275 = vmatprep.subr.mxu0 0.0
  %1276 = vmatpush1.msra.mxu0 0.0
  %1277 = vmatprep.subr.mxu0 0.0
  %1278 = vmatpush1.msra.mxu0 0.0
  %1279 = vmatprep.subr.mxu0 0.0
  %1280 = vmatpush1.msra.mxu0 0.0
  %1281 = vmatprep.subr.mxu0 0.0
  %1282 = vmatpush1.msra.mxu0 0.0
  %1283 = vmatprep.subr.mxu0 0.0
  %1284 = vmatpush1.msra.mxu0 0.0
  %1285 = vmatprep.subr.mxu0 0.0
  %1286 = vmatpush1.msra.mxu0 0.0
  %1287 = vmatprep.subr.mxu0 0.0
  %1288 = vmatpush1.msra.mxu0 0.0
  %1289 = vmatprep.subr.mxu0 0.0
  %1290 = vmatpush1.msra.mxu0 0.0
  %1291 = vmatprep.subr.mxu0 0.0
  %1292 = vmatpush1.msra.mxu0 0.0
  %1293 = vmatprep.subr.mxu0 0.0
  %1294 = vmatpush1.msra.mxu0 0.0
  %1295 = vmatprep.subr.mxu0 0.0
  %1296 = vmatpush1.msra.mxu0 0.0
  %1297 = vmatprep.subr.mxu0 0.0
  %1298 = vmatpush1.msra.mxu0 0.0
  %1299 = vmatprep.subr.mxu0 0.0
  %1300 = vmatpush1.msra.mxu0 0.0
  %1301 = vmatprep.subr.mxu0 0.0
  %1302 = vmatpush1.msra.mxu0 0.0
  %1303 = vmatprep.subr.mxu0 0.0
  %1304 = vmatpush1.msra.mxu0 0.0
  %1305 = vmatprep.subr.mxu0 0.0
  %1306 = vmatpush1.msra.mxu0 0.0
  %1307 = vmatprep.subr.mxu0 0.0
  %1308 = vmatpush1.msra.mxu0 0.0
  %1309 = vmatprep.subr.mxu0 0.0
  %1310 = vmatpush1.msra.mxu0 0.0
  %1311 = vmatprep.subr.mxu0 0.0
  %1312 = vmatpush1.msra.mxu0 0.0
  %1313 = vmatprep.subr.mxu0 0.0
  %1314 = vmatpush1.msra.mxu0 0.0
  %1315 = vmatprep.subr.mxu0 0.0
  %1316 = vmatpush1.msra.mxu0 0.0
  %1317 = vmatprep.mubr.f32.mxu0 0.0
  %1318 = vmatmul.mubr.f32.gmra.mrb[0].mxu0 %v1251
  %v1319 = vpop.f32.mrb[0].mxu0
  %v1320 = vadd.f32 %v254, %v1319
  %v1321 = vpop.f32.mrb[0].mxu0
  %1322 = vdwg.mxu0
  %v1323 = vadd.f32 %v1171, %v1320
  %s1324 = scalar_lea.vmem [#allocation4], 56
  %1325 = vst.msk [vmem:[%s1324] sm:$0xff] %vm257, %v1323
  %s1326 = scalar_lea.vmem [#allocation3], 56
  %v1327 = vld [vmem:[%s1326] sm:$0xff]
  %v1329 = vsel %vm257, %v1323, 0
  %1331 = vmatprep.subr.mxu0 0.0
  %1332 = vmatpush1.msra.mxu0 %v265
  %1333 = vmatprep.subr.mxu0 0.0
  %1334 = vmatpush1.msra.mxu0 0.0
  %1335 = vmatprep.subr.mxu0 0.0
  %1336 = vmatpush1.msra.mxu0 0.0
  %1337 = vmatprep.subr.mxu0 0.0
  %1338 = vmatpush1.msra.mxu0 0.0
  %1339 = vmatprep.subr.mxu0 0.0
  %1340 = vmatpush1.msra.mxu0 0.0
  %1341 = vmatprep.subr.mxu0 0.0
  %1342 = vmatpush1.msra.mxu0 0.0
  %1343 = vmatprep.subr.mxu0 0.0
  %1344 = vmatpush1.msra.mxu0 0.0
  %1345 = vmatprep.subr.mxu0 0.0
  %1346 = vmatpush1.msra.mxu0 0.0
  %1347 = vmatprep.subr.mxu0 0.0
  %1348 = vmatpush1.msra.mxu0 0.0
  %1349 = vmatprep.subr.mxu0 0.0
  %1350 = vmatpush1.msra.mxu0 0.0
  %1351 = vmatprep.subr.mxu0 0.0
  %1352 = vmatpush1.msra.mxu0 0.0
  %1353 = vmatprep.subr.mxu0 0.0
  %1354 = vmatpush1.msra.mxu0 0.0
  %1355 = vmatprep.subr.mxu0 0.0
  %1356 = vmatpush1.msra.mxu0 0.0
  %1357 = vmatprep.subr.mxu0 0.0
  %1358 = vmatpush1.msra.mxu0 0.0
  %1359 = vmatprep.subr.mxu0 0.0
  %1360 = vmatpush1.msra.mxu0 0.0
  %1361 = vmatprep.subr.mxu0 0.0
  %1362 = vmatpush1.msra.mxu0 0.0
  %1363 = vmatprep.subr.mxu0 0.0
  %1364 = vmatpush1.msra.mxu0 0.0
  %1365 = vmatprep.subr.mxu0 0.0
  %1366 = vmatpush1.msra.mxu0 0.0
  %1367 = vmatprep.subr.mxu0 0.0
  %1368 = vmatpush1.msra.mxu0 0.0
  %1369 = vmatprep.subr.mxu0 0.0
  %1370 = vmatpush1.msra.mxu0 0.0
  %1371 = vmatprep.subr.mxu0 0.0
  %1372 = vmatpush1.msra.mxu0 0.0
  %1373 = vmatprep.subr.mxu0 0.0
  %1374 = vmatpush1.msra.mxu0 0.0
  %1375 = vmatprep.subr.mxu0 0.0
  %1376 = vmatpush1.msra.mxu0 0.0
  %1377 = vmatprep.subr.mxu0 0.0
  %1378 = vmatpush1.msra.mxu0 0.0
  %1379 = vmatprep.subr.mxu0 0.0
  %1380 = vmatpush1.msra.mxu0 0.0
  %1381 = vmatprep.subr.mxu0 0.0
  %1382 = vmatpush1.msra.mxu0 0.0
  %1383 = vmatprep.subr.mxu0 0.0
  %1384 = vmatpush1.msra.mxu0 0.0
  %1385 = vmatprep.subr.mxu0 0.0
  %1386 = vmatpush1.msra.mxu0 0.0
  %1387 = vmatprep.subr.mxu0 0.0
  %1388 = vmatpush1.msra.mxu0 0.0
  %1389 = vmatprep.subr.mxu0 0.0
  %1390 = vmatpush1.msra.mxu0 0.0
  %1391 = vmatprep.subr.mxu0 0.0
  %1392 = vmatpush1.msra.mxu0 0.0
  %1393 = vmatprep.subr.mxu0 0.0
  %1394 = vmatpush1.msra.mxu0 0.0
  %1395 = vmatprep.mubr.f32.mxu0 0.0
  %1396 = vmatmul.mubr.f32.gmra.mrb[0].mxu0 %v1329
  %v1397 = vpop.f32.mrb[0].mxu0
  %v1398 = vadd.f32 %v1327, %v1397
  %v1399 = vpop.f32.mrb[0].mxu0
  %1400 = vdwg.mxu0
  %v1401 = vtanh.pop %v1398
  %v1403 = vsel %vm231, %v1401, 0
  %1405 = vmatprep.subr.mxu0 0.0
  %1406 = vmatpush1.msra.mxu0 %v245
  %1407 = vmatprep.subr.mxu0 0.0
  %1408 = vmatpush1.msra.mxu0 %v246
  %1409 = vmatprep.subr.mxu0 0.0
  %1410 = vmatpush1.msra.mxu0 %v247
  %1411 = vmatprep.subr.mxu0 0.0
  %1412 = vmatpush1.msra.mxu0 %v248
  %1413 = vmatprep.subr.mxu0 0.0
  %1414 = vmatpush1.msra.mxu0 0.0
  %1415 = vmatprep.subr.mxu0 0.0
  %1416 = vmatpush1.msra.mxu0 0.0
  %1417 = vmatprep.subr.mxu0 0.0
  %1418 = vmatpush1.msra.mxu0 0.0
  %1419 = vmatprep.subr.mxu0 0.0
  %1420 = vmatpush1.msra.mxu0 0.0
  %1421 = vmatprep.subr.mxu0 0.0
  %1422 = vmatpush1.msra.mxu0 0.0
  %1423 = vmatprep.subr.mxu0 0.0
  %1424 = vmatpush1.msra.mxu0 0.0
  %1425 = vmatprep.subr.mxu0 0.0
  %1426 = vmatpush1.msra.mxu0 0.0
  %1427 = vmatprep.subr.mxu0 0.0
  %1428 = vmatpush1.msra.mxu0 0.0
  %1429 = vmatprep.subr.mxu0 0.0
  %1430 = vmatpush1.msra.mxu0 0.0
  %1431 = vmatprep.subr.mxu0 0.0
  %1432 = vmatpush1.msra.mxu0 0.0
  %1433 = vmatprep.subr.mxu0 0.0
  %1434 = vmatpush1.msra.mxu0 0.0
  %1435 = vmatprep.subr.mxu0 0.0
  %1436 = vmatpush1.msra.mxu0 0.0
  %1437 = vmatprep.subr.mxu0 0.0
  %1438 = vmatpush1.msra.mxu0 0.0
  %1439 = vmatprep.subr.mxu0 0.0
  %1440 = vmatpush1.msra.mxu0 0.0
  %1441 = vmatprep.subr.mxu0 0.0
  %1442 = vmatpush1.msra.mxu0 0.0
  %1443 = vmatprep.subr.mxu0 0.0
  %1444 = vmatpush1.msra.mxu0 0.0
  %1445 = vmatprep.subr.mxu0 0.0
  %1446 = vmatpush1.msra.mxu0 0.0
  %1447 = vmatprep.subr.mxu0 0.0
  %1448 = vmatpush1.msra.mxu0 0.0
  %1449 = vmatprep.subr.mxu0 0.0
  %1450 = vmatpush1.msra.mxu0 0.0
  %1451 = vmatprep.subr.mxu0 0.0
  %1452 = vmatpush1.msra.mxu0 0.0
  %1453 = vmatprep.subr.mxu0 0.0
  %1454 = vmatpush1.msra.mxu0 0.0
  %1455 = vmatprep.subr.mxu0 0.0
  %1456 = vmatpush1.msra.mxu0 0.0
  %1457 = vmatprep.subr.mxu0 0.0
  %1458 = vmatpush1.msra.mxu0 0.0
  %1459 = vmatprep.subr.mxu0 0.0
  %1460 = vmatpush1.msra.mxu0 0.0
  %1461 = vmatprep.subr.mxu0 0.0
  %1462 = vmatpush1.msra.mxu0 0.0
  %1463 = vmatprep.subr.mxu0 0.0
  %1464 = vmatpush1.msra.mxu0 0.0
  %1465 = vmatprep.subr.mxu0 0.0
  %1466 = vmatpush1.msra.mxu0 0.0
  %1467 = vmatprep.subr.mxu0 0.0
  %1468 = vmatpush1.msra.mxu0 0.0
  %1469 = vmatprep.mubr.f32.mxu0 0.0
  %1470 = vmatmul.mubr.f32.gmra.mrb[0].mxu0 %v1403
  %v1471 = vpop.f32.mrb[0].mxu0
  %v1472 = vadd.f32 %v254, %v1471
  %v1473 = vpop.f32.mrb[0].mxu0
  %1474 = vdwg.mxu0
  %v1475 = vadd.f32 %v1323, %v1472
  %s1476 = scalar_lea.vmem [#allocation4], 64
  %1477 = vst.msk [vmem:[%s1476] sm:$0xff] %vm257, %v1475
  %s1478 = scalar_lea.vmem [#allocation3], 64
  %v1479 = vld [vmem:[%s1478] sm:$0xff]
  %v1481 = vsel %vm257, %v1475, 0
  %1483 = vmatprep.subr.mxu0 0.0
  %1484 = vmatpush1.msra.mxu0 %v265
  %1485 = vmatprep.subr.mxu0 0.0
  %1486 = vmatpush1.msra.mxu0 0.0
  %1487 = vmatprep.subr.mxu0 0.0
  %1488 = vmatpush1.msra.mxu0 0.0
  %1489 = vmatprep.subr.mxu0 0.0
  %1490 = vmatpush1.msra.mxu0 0.0
  %1491 = vmatprep.subr.mxu0 0.0
  %1492 = vmatpush1.msra.mxu0 0.0
  %1493 = vmatprep.subr.mxu0 0.0
  %1494 = vmatpush1.msra.mxu0 0.0
  %1495 = vmatprep.subr.mxu0 0.0
  %1496 = vmatpush1.msra.mxu0 0.0
  %1497 = vmatprep.subr.mxu0 0.0
  %1498 = vmatpush1.msra.mxu0 0.0
  %1499 = vmatprep.subr.mxu0 0.0
  %1500 = vmatpush1.msra.mxu0 0.0
  %1501 = vmatprep.subr.mxu0 0.0
  %1502 = vmatpush1.msra.mxu0 0.0
  %1503 = vmatprep.subr.mxu0 0.0
  %1504 = vmatpush1.msra.mxu0 0.0
  %1505 = vmatprep.subr.mxu0 0.0
  %1506 = vmatpush1.msra.mxu0 0.0
  %1507 = vmatprep.subr.mxu0 0.0
  %1508 = vmatpush1.msra.mxu0 0.0
  %1509 = vmatprep.subr.mxu0 0.0
  %1510 = vmatpush1.msra.mxu0 0.0
  %1511 = vmatprep.subr.mxu0 0.0
  %1512 = vmatpush1.msra.mxu0 0.0
  %1513 = vmatprep.subr.mxu0 0.0
  %1514 = vmatpush1.msra.mxu0 0.0
  %1515 = vmatprep.subr.mxu0 0.0
  %1516 = vmatpush1.msra.mxu0 0.0
  %1517 = vmatprep.subr.mxu0 0.0
  %1518 = vmatpush1.msra.mxu0 0.0
  %1519 = vmatprep.subr.mxu0 0.0
  %1520 = vmatpush1.msra.mxu0 0.0
  %1521 = vmatprep.subr.mxu0 0.0
  %1522 = vmatpush1.msra.mxu0 0.0
  %1523 = vmatprep.subr.mxu0 0.0
  %1524 = vmatpush1.msra.mxu0 0.0
  %1525 = vmatprep.subr.mxu0 0.0
  %1526 = vmatpush1.msra.mxu0 0.0
  %1527 = vmatprep.subr.mxu0 0.0
  %1528 = vmatpush1.msra.mxu0 0.0
  %1529 = vmatprep.subr.mxu0 0.0
  %1530 = vmatpush1.msra.mxu0 0.0
  %1531 = vmatprep.subr.mxu0 0.0
  %1532 = vmatpush1.msra.mxu0 0.0
  %1533 = vmatprep.subr.mxu0 0.0
  %1534 = vmatpush1.msra.mxu0 0.0
  %1535 = vmatprep.subr.mxu0 0.0
  %1536 = vmatpush1.msra.mxu0 0.0
  %1537 = vmatprep.subr.mxu0 0.0
  %1538 = vmatpush1.msra.mxu0 0.0
  %1539 = vmatprep.subr.mxu0 0.0
  %1540 = vmatpush1.msra.mxu0 0.0
  %1541 = vmatprep.subr.mxu0 0.0
  %1542 = vmatpush1.msra.mxu0 0.0
  %1543 = vmatprep.subr.mxu0 0.0
  %1544 = vmatpush1.msra.mxu0 0.0
  %1545 = vmatprep.subr.mxu0 0.0
  %1546 = vmatpush1.msra.mxu0 0.0
  %1547 = vmatprep.mubr.f32.mxu0 0.0
  %1548 = vmatmul.mubr.f32.gmra.mrb[0].mxu0 %v1481
  %v1549 = vpop.f32.mrb[0].mxu0
  %v1550 = vadd.f32 %v1479, %v1549
  %v1551 = vpop.f32.mrb[0].mxu0
  %1552 = vdwg.mxu0
  %v1553 = vtanh.pop %v1550
  %v1555 = vsel %vm231, %v1553, 0
  %1557 = vmatprep.subr.mxu0 0.0
  %1558 = vmatpush1.msra.mxu0 %v245
  %1559 = vmatprep.subr.mxu0 0.0
  %1560 = vmatpush1.msra.mxu0 %v246
  %1561 = vmatprep.subr.mxu0 0.0
  %1562 = vmatpush1.msra.mxu0 %v247
  %1563 = vmatprep.subr.mxu0 0.0
  %1564 = vmatpush1.msra.mxu0 %v248
  %1565 = vmatprep.subr.mxu0 0.0
  %1566 = vmatpush1.msra.mxu0 0.0
  %1567 = vmatprep.subr.mxu0 0.0
  %1568 = vmatpush1.msra.mxu0 0.0
  %1569 = vmatprep.subr.mxu0 0.0
  %1570 = vmatpush1.msra.mxu0 0.0
  %1571 = vmatprep.subr.mxu0 0.0
  %1572 = vmatpush1.msra.mxu0 0.0
  %1573 = vmatprep.subr.mxu0 0.0
  %1574 = vmatpush1.msra.mxu0 0.0
  %1575 = vmatprep.subr.mxu0 0.0
  %1576 = vmatpush1.msra.mxu0 0.0
  %1577 = vmatprep.subr.mxu0 0.0
  %1578 = vmatpush1.msra.mxu0 0.0
  %1579 = vmatprep.subr.mxu0 0.0
  %1580 = vmatpush1.msra.mxu0 0.0
  %1581 = vmatprep.subr.mxu0 0.0
  %1582 = vmatpush1.msra.mxu0 0.0
  %1583 = vmatprep.subr.mxu0 0.0
  %1584 = vmatpush1.msra.mxu0 0.0
  %1585 = vmatprep.subr.mxu0 0.0
  %1586 = vmatpush1.msra.mxu0 0.0
  %1587 = vmatprep.subr.mxu0 0.0
  %1588 = vmatpush1.msra.mxu0 0.0
  %1589 = vmatprep.subr.mxu0 0.0
  %1590 = vmatpush1.msra.mxu0 0.0
  %1591 = vmatprep.subr.mxu0 0.0
  %1592 = vmatpush1.msra.mxu0 0.0
  %1593 = vmatprep.subr.mxu0 0.0
  %1594 = vmatpush1.msra.mxu0 0.0
  %1595 = vmatprep.subr.mxu0 0.0
  %1596 = vmatpush1.msra.mxu0 0.0
  %1597 = vmatprep.subr.mxu0 0.0
  %1598 = vmatpush1.msra.mxu0 0.0
  %1599 = vmatprep.subr.mxu0 0.0
  %1600 = vmatpush1.msra.mxu0 0.0
  %1601 = vmatprep.subr.mxu0 0.0
  %1602 = vmatpush1.msra.mxu0 0.0
  %1603 = vmatprep.subr.mxu0 0.0
  %1604 = vmatpush1.msra.mxu0 0.0
  %1605 = vmatprep.subr.mxu0 0.0
  %1606 = vmatpush1.msra.mxu0 0.0
  %1607 = vmatprep.subr.mxu0 0.0
  %1608 = vmatpush1.msra.mxu0 0.0
  %1609 = vmatprep.subr.mxu0 0.0
  %1610 = vmatpush1.msra.mxu0 0.0
  %1611 = vmatprep.subr.mxu0 0.0
  %1612 = vmatpush1.msra.mxu0 0.0
  %1613 = vmatprep.subr.mxu0 0.0
  %1614 = vmatpush1.msra.mxu0 0.0
  %1615 = vmatprep.subr.mxu0 0.0
  %1616 = vmatpush1.msra.mxu0 0.0
  %1617 = vmatprep.subr.mxu0 0.0
  %1618 = vmatpush1.msra.mxu0 0.0
  %1619 = vmatprep.subr.mxu0 0.0
  %1620 = vmatpush1.msra.mxu0 0.0
  %1621 = vmatprep.mubr.f32.mxu0 0.0
  %1622 = vmatmul.mubr.f32.gmra.mrb[0].mxu0 %v1555
  %v1623 = vpop.f32.mrb[0].mxu0
  %v1624 = vadd.f32 %v254, %v1623
  %v1625 = vpop.f32.mrb[0].mxu0
  %1626 = vdwg.mxu0
  %v1627 = vadd.f32 %v1475, %v1624
  %s1628 = scalar_lea.vmem [#allocation4], 72
  %1629 = vst.msk [vmem:[%s1628] sm:$0xff] %vm257, %v1627
  %s1630 = scalar_lea.vmem [#allocation3], 72
  %v1631 = vld [vmem:[%s1630] sm:$0xff]
  %v1633 = vsel %vm257, %v1627, 0
  %1635 = vmatprep.subr.mxu0 0.0
  %1636 = vmatpush1.msra.mxu0 %v265
  %1637 = vmatprep.subr.mxu0 0.0
  %1638 = vmatpush1.msra.mxu0 0.0
  %1639 = vmatprep.subr.mxu0 0.0
  %1640 = vmatpush1.msra.mxu0 0.0
  %1641 = vmatprep.subr.mxu0 0.0
  %1642 = vmatpush1.msra.mxu0 0.0
  %1643 = vmatprep.subr.mxu0 0.0
  %1644 = vmatpush1.msra.mxu0 0.0
  %1645 = vmatprep.subr.mxu0 0.0
  %1646 = vmatpush1.msra.mxu0 0.0
  %1647 = vmatprep.subr.mxu0 0.0
  %1648 = vmatpush1.msra.mxu0 0.0
  %1649 = vmatprep.subr.mxu0 0.0
  %1650 = vmatpush1.msra.mxu0 0.0
  %1651 = vmatprep.subr.mxu0 0.0
  %1652 = vmatpush1.msra.mxu0 0.0
  %1653 = vmatprep.subr.mxu0 0.0
  %1654 = vmatpush1.msra.mxu0 0.0
  %1655 = vmatprep.subr.mxu0 0.0
  %1656 = vmatpush1.msra.mxu0 0.0
  %1657 = vmatprep.subr.mxu0 0.0
  %1658 = vmatpush1.msra.mxu0 0.0
  %1659 = vmatprep.subr.mxu0 0.0
  %1660 = vmatpush1.msra.mxu0 0.0
  %1661 = vmatprep.subr.mxu0 0.0
  %1662 = vmatpush1.msra.mxu0 0.0
  %1663 = vmatprep.subr.mxu0 0.0
  %1664 = vmatpush1.msra.mxu0 0.0
  %1665 = vmatprep.subr.mxu0 0.0
  %1666 = vmatpush1.msra.mxu0 0.0
  %1667 = vmatprep.subr.mxu0 0.0
  %1668 = vmatpush1.msra.mxu0 0.0
  %1669 = vmatprep.subr.mxu0 0.0
  %1670 = vmatpush1.msra.mxu0 0.0
  %1671 = vmatprep.subr.mxu0 0.0
  %1672 = vmatpush1.msra.mxu0 0.0
  %1673 = vmatprep.subr.mxu0 0.0
  %1674 = vmatpush1.msra.mxu0 0.0
  %1675 = vmatprep.subr.mxu0 0.0
  %1676 = vmatpush1.msra.mxu0 0.0
  %1677 = vmatprep.subr.mxu0 0.0
  %1678 = vmatpush1.msra.mxu0 0.0
  %1679 = vmatprep.subr.mxu0 0.0
  %1680 = vmatpush1.msra.mxu0 0.0
  %1681 = vmatprep.subr.mxu0 0.0
  %1682 = vmatpush1.msra.mxu0 0.0
  %1683 = vmatprep.subr.mxu0 0.0
  %1684 = vmatpush1.msra.mxu0 0.0
  %1685 = vmatprep.subr.mxu0 0.0
  %1686 = vmatpush1.msra.mxu0 0.0
  %1687 = vmatprep.subr.mxu0 0.0
  %1688 = vmatpush1.msra.mxu0 0.0
  %1689 = vmatprep.subr.mxu0 0.0
  %1690 = vmatpush1.msra.mxu0 0.0
  %1691 = vmatprep.subr.mxu0 0.0
  %1692 = vmatpush1.msra.mxu0 0.0
  %1693 = vmatprep.subr.mxu0 0.0
  %1694 = vmatpush1.msra.mxu0 0.0
  %1695 = vmatprep.subr.mxu0 0.0
  %1696 = vmatpush1.msra.mxu0 0.0
  %1697 = vmatprep.subr.mxu0 0.0
  %1698 = vmatpush1.msra.mxu0 0.0
  %1699 = vmatprep.mubr.f32.mxu0 0.0
  %1700 = vmatmul.mubr.f32.gmra.mrb[0].mxu0 %v1633
  %v1701 = vpop.f32.mrb[0].mxu0
  %v1702 = vadd.f32 %v1631, %v1701
  %v1703 = vpop.f32.mrb[0].mxu0
  %1704 = vdwg.mxu0
  %v1705 = vtanh.pop %v1702
  %v1707 = vsel %vm231, %v1705, 0
  %1709 = vmatprep.subr.mxu0 0.0
  %1710 = vmatpush1.msra.mxu0 %v245
  %1711 = vmatprep.subr.mxu0 0.0
  %1712 = vmatpush1.msra.mxu0 %v246
  %1713 = vmatprep.subr.mxu0 0.0
  %1714 = vmatpush1.msra.mxu0 %v247
  %1715 = vmatprep.subr.mxu0 0.0
  %1716 = vmatpush1.msra.mxu0 %v248
  %1717 = vmatprep.subr.mxu0 0.0
  %1718 = vmatpush1.msra.mxu0 0.0
  %1719 = vmatprep.subr.mxu0 0.0
  %1720 = vmatpush1.msra.mxu0 0.0
  %1721 = vmatprep.subr.mxu0 0.0
  %1722 = vmatpush1.msra.mxu0 0.0
  %1723 = vmatprep.subr.mxu0 0.0
  %1724 = vmatpush1.msra.mxu0 0.0
  %1725 = vmatprep.subr.mxu0 0.0
  %1726 = vmatpush1.msra.mxu0 0.0
  %1727 = vmatprep.subr.mxu0 0.0
  %1728 = vmatpush1.msra.mxu0 0.0
  %1729 = vmatprep.subr.mxu0 0.0
  %1730 = vmatpush1.msra.mxu0 0.0
  %1731 = vmatprep.subr.mxu0 0.0
  %1732 = vmatpush1.msra.mxu0 0.0
  %1733 = vmatprep.subr.mxu0 0.0
  %1734 = vmatpush1.msra.mxu0 0.0
  %1735 = vmatprep.subr.mxu0 0.0
  %1736 = vmatpush1.msra.mxu0 0.0
  %1737 = vmatprep.subr.mxu0 0.0
  %1738 = vmatpush1.msra.mxu0 0.0
  %1739 = vmatprep.subr.mxu0 0.0
  %1740 = vmatpush1.msra.mxu0 0.0
  %1741 = vmatprep.subr.mxu0 0.0
  %1742 = vmatpush1.msra.mxu0 0.0
  %1743 = vmatprep.subr.mxu0 0.0
  %1744 = vmatpush1.msra.mxu0 0.0
  %1745 = vmatprep.subr.mxu0 0.0
  %1746 = vmatpush1.msra.mxu0 0.0
  %1747 = vmatprep.subr.mxu0 0.0
  %1748 = vmatpush1.msra.mxu0 0.0
  %1749 = vmatprep.subr.mxu0 0.0
  %1750 = vmatpush1.msra.mxu0 0.0
  %1751 = vmatprep.subr.mxu0 0.0
  %1752 = vmatpush1.msra.mxu0 0.0
  %1753 = vmatprep.subr.mxu0 0.0
  %1754 = vmatpush1.msra.mxu0 0.0
  %1755 = vmatprep.subr.mxu0 0.0
  %1756 = vmatpush1.msra.mxu0 0.0
  %1757 = vmatprep.subr.mxu0 0.0
  %1758 = vmatpush1.msra.mxu0 0.0
  %1759 = vmatprep.subr.mxu0 0.0
  %1760 = vmatpush1.msra.mxu0 0.0
  %1761 = vmatprep.subr.mxu0 0.0
  %1762 = vmatpush1.msra.mxu0 0.0
  %1763 = vmatprep.subr.mxu0 0.0
  %1764 = vmatpush1.msra.mxu0 0.0
  %1765 = vmatprep.subr.mxu0 0.0
  %1766 = vmatpush1.msra.mxu0 0.0
  %1767 = vmatprep.subr.mxu0 0.0
  %1768 = vmatpush1.msra.mxu0 0.0
  %1769 = vmatprep.subr.mxu0 0.0
  %1770 = vmatpush1.msra.mxu0 0.0
  %1771 = vmatprep.subr.mxu0 0.0
  %1772 = vmatpush1.msra.mxu0 0.0
  %1773 = vmatprep.mubr.f32.mxu0 0.0
  %1774 = vmatmul.mubr.f32.gmra.mrb[0].mxu0 %v1707
  %v1775 = vpop.f32.mrb[0].mxu0
  %v1776 = vadd.f32 %v254, %v1775
  %v1777 = vpop.f32.mrb[0].mxu0
  %1778 = vdwg.mxu0
  %v1779 = vadd.f32 %v1627, %v1776
  %s1780 = scalar_lea.vmem [#allocation4], 80
  %1781 = vst.msk [vmem:[%s1780] sm:$0xff] %vm257, %v1779
  %s1782 = scalar_lea.vmem [#allocation3], 80
  %v1783 = vld [vmem:[%s1782] sm:$0xff]
  %v1785 = vsel %vm257, %v1779, 0
  %1787 = vmatprep.subr.mxu0 0.0
  %1788 = vmatpush1.msra.mxu0 %v265
  %1789 = vmatprep.subr.mxu0 0.0
  %1790 = vmatpush1.msra.mxu0 0.0
  %1791 = vmatprep.subr.mxu0 0.0
  %1792 = vmatpush1.msra.mxu0 0.0
  %1793 = vmatprep.subr.mxu0 0.0
  %1794 = vmatpush1.msra.mxu0 0.0
  %1795 = vmatprep.subr.mxu0 0.0
  %1796 = vmatpush1.msra.mxu0 0.0
  %1797 = vmatprep.subr.mxu0 0.0
  %1798 = vmatpush1.msra.mxu0 0.0
  %1799 = vmatprep.subr.mxu0 0.0
  %1800 = vmatpush1.msra.mxu0 0.0
  %1801 = vmatprep.subr.mxu0 0.0
  %1802 = vmatpush1.msra.mxu0 0.0
  %1803 = vmatprep.subr.mxu0 0.0
  %1804 = vmatpush1.msra.mxu0 0.0
  %1805 = vmatprep.subr.mxu0 0.0
  %1806 = vmatpush1.msra.mxu0 0.0
  %1807 = vmatprep.subr.mxu0 0.0
  %1808 = vmatpush1.msra.mxu0 0.0
  %1809 = vmatprep.subr.mxu0 0.0
  %1810 = vmatpush1.msra.mxu0 0.0
  %1811 = vmatprep.subr.mxu0 0.0
  %1812 = vmatpush1.msra.mxu0 0.0
  %1813 = vmatprep.subr.mxu0 0.0
  %1814 = vmatpush1.msra.mxu0 0.0
  %1815 = vmatprep.subr.mxu0 0.0
  %1816 = vmatpush1.msra.mxu0 0.0
  %1817 = vmatprep.subr.mxu0 0.0
  %1818 = vmatpush1.msra.mxu0 0.0
  %1819 = vmatprep.subr.mxu0 0.0
  %1820 = vmatpush1.msra.mxu0 0.0
  %1821 = vmatprep.subr.mxu0 0.0
  %1822 = vmatpush1.msra.mxu0 0.0
  %1823 = vmatprep.subr.mxu0 0.0
  %1824 = vmatpush1.msra.mxu0 0.0
  %1825 = vmatprep.subr.mxu0 0.0
  %1826 = vmatpush1.msra.mxu0 0.0
  %1827 = vmatprep.subr.mxu0 0.0
  %1828 = vmatpush1.msra.mxu0 0.0
  %1829 = vmatprep.subr.mxu0 0.0
  %1830 = vmatpush1.msra.mxu0 0.0
  %1831 = vmatprep.subr.mxu0 0.0
  %1832 = vmatpush1.msra.mxu0 0.0
  %1833 = vmatprep.subr.mxu0 0.0
  %1834 = vmatpush1.msra.mxu0 0.0
  %1835 = vmatprep.subr.mxu0 0.0
  %1836 = vmatpush1.msra.mxu0 0.0
  %1837 = vmatprep.subr.mxu0 0.0
  %1838 = vmatpush1.msra.mxu0 0.0
  %1839 = vmatprep.subr.mxu0 0.0
  %1840 = vmatpush1.msra.mxu0 0.0
  %1841 = vmatprep.subr.mxu0 0.0
  %1842 = vmatpush1.msra.mxu0 0.0
  %1843 = vmatprep.subr.mxu0 0.0
  %1844 = vmatpush1.msra.mxu0 0.0
  %1845 = vmatprep.subr.mxu0 0.0
  %1846 = vmatpush1.msra.mxu0 0.0
  %1847 = vmatprep.subr.mxu0 0.0
  %1848 = vmatpush1.msra.mxu0 0.0
  %1849 = vmatprep.subr.mxu0 0.0
  %1850 = vmatpush1.msra.mxu0 0.0
  %1851 = vmatprep.mubr.f32.mxu0 0.0
  %1852 = vmatmul.mubr.f32.gmra.mrb[0].mxu0 %v1785
  %v1853 = vpop.f32.mrb[0].mxu0
  %v1854 = vadd.f32 %v1783, %v1853
  %v1855 = vpop.f32.mrb[0].mxu0
  %1856 = vdwg.mxu0
  %v1857 = vtanh.pop %v1854
  %v1859 = vsel %vm231, %v1857, 0
  %1861 = vmatprep.subr.mxu0 0.0
  %1862 = vmatpush1.msra.mxu0 %v245
  %1863 = vmatprep.subr.mxu0 0.0
  %1864 = vmatpush1.msra.mxu0 %v246
  %1865 = vmatprep.subr.mxu0 0.0
  %1866 = vmatpush1.msra.mxu0 %v247
  %1867 = vmatprep.subr.mxu0 0.0
  %1868 = vmatpush1.msra.mxu0 %v248
  %1869 = vmatprep.subr.mxu0 0.0
  %1870 = vmatpush1.msra.mxu0 0.0
  %1871 = vmatprep.subr.mxu0 0.0
  %1872 = vmatpush1.msra.mxu0 0.0
  %1873 = vmatprep.subr.mxu0 0.0
  %1874 = vmatpush1.msra.mxu0 0.0
  %1875 = vmatprep.subr.mxu0 0.0
  %1876 = vmatpush1.msra.mxu0 0.0
  %1877 = vmatprep.subr.mxu0 0.0
  %1878 = vmatpush1.msra.mxu0 0.0
  %1879 = vmatprep.subr.mxu0 0.0
  %1880 = vmatpush1.msra.mxu0 0.0
  %1881 = vmatprep.subr.mxu0 0.0
  %1882 = vmatpush1.msra.mxu0 0.0
  %1883 = vmatprep.subr.mxu0 0.0
  %1884 = vmatpush1.msra.mxu0 0.0
  %1885 = vmatprep.subr.mxu0 0.0
  %1886 = vmatpush1.msra.mxu0 0.0
  %1887 = vmatprep.subr.mxu0 0.0
  %1888 = vmatpush1.msra.mxu0 0.0
  %1889 = vmatprep.subr.mxu0 0.0
  %1890 = vmatpush1.msra.mxu0 0.0
  %1891 = vmatprep.subr.mxu0 0.0
  %1892 = vmatpush1.msra.mxu0 0.0
  %1893 = vmatprep.subr.mxu0 0.0
  %1894 = vmatpush1.msra.mxu0 0.0
  %1895 = vmatprep.subr.mxu0 0.0
  %1896 = vmatpush1.msra.mxu0 0.0
  %1897 = vmatprep.subr.mxu0 0.0
  %1898 = vmatpush1.msra.mxu0 0.0
  %1899 = vmatprep.subr.mxu0 0.0
  %1900 = vmatpush1.msra.mxu0 0.0
  %1901 = vmatprep.subr.mxu0 0.0
  %1902 = vmatpush1.msra.mxu0 0.0
  %1903 = vmatprep.subr.mxu0 0.0
  %1904 = vmatpush1.msra.mxu0 0.0
  %1905 = vmatprep.subr.mxu0 0.0
  %1906 = vmatpush1.msra.mxu0 0.0
  %1907 = vmatprep.subr.mxu0 0.0
  %1908 = vmatpush1.msra.mxu0 0.0
  %1909 = vmatprep.subr.mxu0 0.0
  %1910 = vmatpush1.msra.mxu0 0.0
  %1911 = vmatprep.subr.mxu0 0.0
  %1912 = vmatpush1.msra.mxu0 0.0
  %1913 = vmatprep.subr.mxu0 0.0
  %1914 = vmatpush1.msra.mxu0 0.0
  %1915 = vmatprep.subr.mxu0 0.0
  %1916 = vmatpush1.msra.mxu0 0.0
  %1917 = vmatprep.subr.mxu0 0.0
  %1918 = vmatpush1.msra.mxu0 0.0
  %1919 = vmatprep.subr.mxu0 0.0
  %1920 = vmatpush1.msra.mxu0 0.0
  %1921 = vmatprep.subr.mxu0 0.0
  %1922 = vmatpush1.msra.mxu0 0.0
  %1923 = vmatprep.subr.mxu0 0.0
  %1924 = vmatpush1.msra.mxu0 0.0
  %1925 = vmatprep.mubr.f32.mxu0 0.0
  %1926 = vmatmul.mubr.f32.gmra.mrb[0].mxu0 %v1859
  %v1927 = vpop.f32.mrb[0].mxu0
  %v1928 = vadd.f32 %v254, %v1927
  %v1929 = vpop.f32.mrb[0].mxu0
  %1930 = vdwg.mxu0
  %v1931 = vadd.f32 %v1779, %v1928
  %s1932 = scalar_lea.vmem [#allocation4], 88
  %1933 = vst.msk [vmem:[%s1932] sm:$0xff] %vm257, %v1931
  %s1934 = scalar_lea.vmem [#allocation3], 88
  %v1935 = vld [vmem:[%s1934] sm:$0xff]
  %v1937 = vsel %vm257, %v1931, 0
  %1939 = vmatprep.subr.mxu0 0.0
  %1940 = vmatpush1.msra.mxu0 %v265
  %1941 = vmatprep.subr.mxu0 0.0
  %1942 = vmatpush1.msra.mxu0 0.0
  %1943 = vmatprep.subr.mxu0 0.0
  %1944 = vmatpush1.msra.mxu0 0.0
  %1945 = vmatprep.subr.mxu0 0.0
  %1946 = vmatpush1.msra.mxu0 0.0
  %1947 = vmatprep.subr.mxu0 0.0
  %1948 = vmatpush1.msra.mxu0 0.0
  %1949 = vmatprep.subr.mxu0 0.0
  %1950 = vmatpush1.msra.mxu0 0.0
  %1951 = vmatprep.subr.mxu0 0.0
  %1952 = vmatpush1.msra.mxu0 0.0
  %1953 = vmatprep.subr.mxu0 0.0
  %1954 = vmatpush1.msra.mxu0 0.0
  %1955 = vmatprep.subr.mxu0 0.0
  %1956 = vmatpush1.msra.mxu0 0.0
  %1957 = vmatprep.subr.mxu0 0.0
  %1958 = vmatpush1.msra.mxu0 0.0
  %1959 = vmatprep.subr.mxu0 0.0
  %1960 = vmatpush1.msra.mxu0 0.0
  %1961 = vmatprep.subr.mxu0 0.0
  %1962 = vmatpush1.msra.mxu0 0.0
  %1963 = vmatprep.subr.mxu0 0.0
  %1964 = vmatpush1.msra.mxu0 0.0
  %1965 = vmatprep.subr.mxu0 0.0
  %1966 = vmatpush1.msra.mxu0 0.0
  %1967 = vmatprep.subr.mxu0 0.0
  %1968 = vmatpush1.msra.mxu0 0.0
  %1969 = vmatprep.subr.mxu0 0.0
  %1970 = vmatpush1.msra.mxu0 0.0
  %1971 = vmatprep.subr.mxu0 0.0
  %1972 = vmatpush1.msra.mxu0 0.0
  %1973 = vmatprep.subr.mxu0 0.0
  %1974 = vmatpush1.msra.mxu0 0.0
  %1975 = vmatprep.subr.mxu0 0.0
  %1976 = vmatpush1.msra.mxu0 0.0
  %1977 = vmatprep.subr.mxu0 0.0
  %1978 = vmatpush1.msra.mxu0 0.0
  %1979 = vmatprep.subr.mxu0 0.0
  %1980 = vmatpush1.msra.mxu0 0.0
  %1981 = vmatprep.subr.mxu0 0.0
  %1982 = vmatpush1.msra.mxu0 0.0
  %1983 = vmatprep.subr.mxu0 0.0
  %1984 = vmatpush1.msra.mxu0 0.0
  %1985 = vmatprep.subr.mxu0 0.0
  %1986 = vmatpush1.msra.mxu0 0.0
  %1987 = vmatprep.subr.mxu0 0.0
  %1988 = vmatpush1.msra.mxu0 0.0
  %1989 = vmatprep.subr.mxu0 0.0
  %1990 = vmatpush1.msra.mxu0 0.0
  %1991 = vmatprep.subr.mxu0 0.0
  %1992 = vmatpush1.msra.mxu0 0.0
  %1993 = vmatprep.subr.mxu0 0.0
  %1994 = vmatpush1.msra.mxu0 0.0
  %1995 = vmatprep.subr.mxu0 0.0
  %1996 = vmatpush1.msra.mxu0 0.0
  %1997 = vmatprep.subr.mxu0 0.0
  %1998 = vmatpush1.msra.mxu0 0.0
  %1999 = vmatprep.subr.mxu0 0.0
  %2000 = vmatpush1.msra.mxu0 0.0
  %2001 = vmatprep.subr.mxu0 0.0
  %2002 = vmatpush1.msra.mxu0 0.0
  %2003 = vmatprep.mubr.f32.mxu0 0.0
  %2004 = vmatmul.mubr.f32.gmra.mrb[0].mxu0 %v1937
  %v2005 = vpop.f32.mrb[0].mxu0
  %v2006 = vadd.f32 %v1935, %v2005
  %v2007 = vpop.f32.mrb[0].mxu0
  %2008 = vdwg.mxu0
  %v2009 = vtanh.pop %v2006
  %v2011 = vsel %vm231, %v2009, 0
  %2013 = vmatprep.subr.mxu0 0.0
  %2014 = vmatpush1.msra.mxu0 %v245
  %2015 = vmatprep.subr.mxu0 0.0
  %2016 = vmatpush1.msra.mxu0 %v246
  %2017 = vmatprep.subr.mxu0 0.0
  %2018 = vmatpush1.msra.mxu0 %v247
  %2019 = vmatprep.subr.mxu0 0.0
  %2020 = vmatpush1.msra.mxu0 %v248
  %2021 = vmatprep.subr.mxu0 0.0
  %2022 = vmatpush1.msra.mxu0 0.0
  %2023 = vmatprep.subr.mxu0 0.0
  %2024 = vmatpush1.msra.mxu0 0.0
  %2025 = vmatprep.subr.mxu0 0.0
  %2026 = vmatpush1.msra.mxu0 0.0
  %2027 = vmatprep.subr.mxu0 0.0
  %2028 = vmatpush1.msra.mxu0 0.0
  %2029 = vmatprep.subr.mxu0 0.0
  %2030 = vmatpush1.msra.mxu0 0.0
  %2031 = vmatprep.subr.mxu0 0.0
  %2032 = vmatpush1.msra.mxu0 0.0
  %2033 = vmatprep.subr.mxu0 0.0
  %2034 = vmatpush1.msra.mxu0 0.0
  %2035 = vmatprep.subr.mxu0 0.0
  %2036 = vmatpush1.msra.mxu0 0.0
  %2037 = vmatprep.subr.mxu0 0.0
  %2038 = vmatpush1.msra.mxu0 0.0
  %2039 = vmatprep.subr.mxu0 0.0
  %2040 = vmatpush1.msra.mxu0 0.0
  %2041 = vmatprep.subr.mxu0 0.0
  %2042 = vmatpush1.msra.mxu0 0.0
  %2043 = vmatprep.subr.mxu0 0.0
  %2044 = vmatpush1.msra.mxu0 0.0
  %2045 = vmatprep.subr.mxu0 0.0
  %2046 = vmatpush1.msra.mxu0 0.0
  %2047 = vmatprep.subr.mxu0 0.0
  %2048 = vmatpush1.msra.mxu0 0.0
  %2049 = vmatprep.subr.mxu0 0.0
  %2050 = vmatpush1.msra.mxu0 0.0
  %2051 = vmatprep.subr.mxu0 0.0
  %2052 = vmatpush1.msra.mxu0 0.0
  %2053 = vmatprep.subr.mxu0 0.0
  %2054 = vmatpush1.msra.mxu0 0.0
  %2055 = vmatprep.subr.mxu0 0.0
  %2056 = vmatpush1.msra.mxu0 0.0
  %2057 = vmatprep.subr.mxu0 0.0
  %2058 = vmatpush1.msra.mxu0 0.0
  %2059 = vmatprep.subr.mxu0 0.0
  %2060 = vmatpush1.msra.mxu0 0.0
  %2061 = vmatprep.subr.mxu0 0.0
  %2062 = vmatpush1.msra.mxu0 0.0
  %2063 = vmatprep.subr.mxu0 0.0
  %2064 = vmatpush1.msra.mxu0 0.0
  %2065 = vmatprep.subr.mxu0 0.0
  %2066 = vmatpush1.msra.mxu0 0.0
  %2067 = vmatprep.subr.mxu0 0.0
  %2068 = vmatpush1.msra.mxu0 0.0
  %2069 = vmatprep.subr.mxu0 0.0
  %2070 = vmatpush1.msra.mxu0 0.0
  %2071 = vmatprep.subr.mxu0 0.0
  %2072 = vmatpush1.msra.mxu0 0.0
  %2073 = vmatprep.subr.mxu0 0.0
  %2074 = vmatpush1.msra.mxu0 0.0
  %2075 = vmatprep.subr.mxu0 0.0
  %2076 = vmatpush1.msra.mxu0 0.0
  %2077 = vmatprep.mubr.f32.mxu0 0.0
  %2078 = vmatmul.mubr.f32.gmra.mrb[0].mxu0 %v2011
  %v2079 = vpop.f32.mrb[0].mxu0
  %v2080 = vadd.f32 %v254, %v2079
  %v2081 = vpop.f32.mrb[0].mxu0
  %2082 = vdwg.mxu0
  %v2083 = vadd.f32 %v1931, %v2080
  %2084 = vst.msk [vmem:[#allocation2] sm:$0xff] %vm257, %v2083
  %v2085 = vld [vmem:[#allocation4] sm:$0xff]
  %v2086 = vld [vmem:[#allocation4 + $0x8] sm:$0xff]
  %v2087 = vld [vmem:[#allocation4 + $0x10] sm:$0xff]
  %v2088 = vld [vmem:[#allocation4 + $0x18] sm:$0xff]
  %v2089 = vld [vmem:[#allocation4 + $0x20] sm:$0xff]
  %v2090 = vld [vmem:[#allocation4 + $0x28] sm:$0xff]
  %v2091 = vld [vmem:[#allocation4 + $0x30] sm:$0xff]
  %v2092 = vld [vmem:[#allocation4 + $0x38] sm:$0xff]
  %v2093 = vld [vmem:[#allocation4 + $0x40] sm:$0xff]
  %v2094 = vld [vmem:[#allocation4 + $0x48] sm:$0xff]
  %v2095 = vld [vmem:[#allocation4 + $0x50] sm:$0xff]
  %v2096 = vld [vmem:[#allocation4 + $0x58] sm:$0xff]
  %v2097 = vld [vmem:[%s7] sm:$0xf]
  %v2098 = vld [vmem:[%s8] sm:$0x1]
  %v2100 = vlaneseq
  %v2101 = vshrl.u32 %v2100, 7
  %v2102 = vsub.s32 0, %v2101
  %v2103 = vrot.slane %v2098, %v2102
  %v2106 = vsel %vm257, %v2085, 0
  %v2109 = vsel %vm257, %v2086, 0
  %v2112 = vsel %vm257, %v2087, 0
  %v2115 = vsel %vm257, %v2088, 0
  %v2118 = vsel %vm257, %v2089, 0
  %v2121 = vsel %vm257, %v2090, 0
  %v2124 = vsel %vm257, %v2091, 0
  %v2127 = vsel %vm257, %v2092, 0
  %v2130 = vsel %vm257, %v2093, 0
  %v2133 = vsel %vm257, %v2094, 0
  %v2136 = vsel %vm257, %v2095, 0
  %v2139 = vsel %vm257, %v2096, 0
  %v2142 = vsel %vm263, %v2097, 0
  %2144 = vmatprep.subr.mxu0 0.0
  %2145 = vmatpush1.msra.mxu0 %v2142
  %2146 = vmatprep.subr.mxu0 0.0
  %2147 = vmatpush1.msra.mxu0 0.0
  %2148 = vmatprep.subr.mxu0 0.0
  %2149 = vmatpush1.msra.mxu0 0.0
  %2150 = vmatprep.subr.mxu0 0.0
  %2151 = vmatpush1.msra.mxu0 0.0
  %2152 = vmatprep.subr.mxu0 0.0
  %2153 = vmatpush1.msra.mxu0 0.0
  %2154 = vmatprep.subr.mxu0 0.0
  %2155 = vmatpush1.msra.mxu0 0.0
  %2156 = vmatprep.subr.mxu0 0.0
  %2157 = vmatpush1.msra.mxu0 0.0
  %2158 = vmatprep.subr.mxu0 0.0
  %2159 = vmatpush1.msra.mxu0 0.0
  %2160 = vmatprep.subr.mxu0 0.0
  %2161 = vmatpush1.msra.mxu0 0.0
  %2162 = vmatprep.subr.mxu0 0.0
  %2163 = vmatpush1.msra.mxu0 0.0
  %2164 = vmatprep.subr.mxu0 0.0
  %2165 = vmatpush1.msra.mxu0 0.0
  %2166 = vmatprep.subr.mxu0 0.0
  %2167 = vmatpush1.msra.mxu0 0.0
  %2168 = vmatprep.subr.mxu0 0.0
  %2169 = vmatpush1.msra.mxu0 0.0
  %2170 = vmatprep.subr.mxu0 0.0
  %2171 = vmatpush1.msra.mxu0 0.0
  %2172 = vmatprep.subr.mxu0 0.0
  %2173 = vmatpush1.msra.mxu0 0.0
  %2174 = vmatprep.subr.mxu0 0.0
  %2175 = vmatpush1.msra.mxu0 0.0
  %2176 = vmatprep.subr.mxu0 0.0
  %2177 = vmatpush1.msra.mxu0 0.0
  %2178 = vmatprep.subr.mxu0 0.0
  %2179 = vmatpush1.msra.mxu0 0.0
  %2180 = vmatprep.subr.mxu0 0.0
  %2181 = vmatpush1.msra.mxu0 0.0
  %2182 = vmatprep.subr.mxu0 0.0
  %2183 = vmatpush1.msra.mxu0 0.0
  %2184 = vmatprep.subr.mxu0 0.0
  %2185 = vmatpush1.msra.mxu0 0.0
  %2186 = vmatprep.subr.mxu0 0.0
  %2187 = vmatpush1.msra.mxu0 0.0
  %2188 = vmatprep.subr.mxu0 0.0
  %2189 = vmatpush1.msra.mxu0 0.0
  %2190 = vmatprep.subr.mxu0 0.0
  %2191 = vmatpush1.msra.mxu0 0.0
  %2192 = vmatprep.subr.mxu0 0.0
  %2193 = vmatpush1.msra.mxu0 0.0
  %2194 = vmatprep.subr.mxu0 0.0
  %2195 = vmatpush1.msra.mxu0 0.0
  %2196 = vmatprep.subr.mxu0 0.0
  %2197 = vmatpush1.msra.mxu0 0.0
  %2198 = vmatprep.subr.mxu0 0.0
  %2199 = vmatpush1.msra.mxu0 0.0
  %2200 = vmatprep.subr.mxu0 0.0
  %2201 = vmatpush1.msra.mxu0 0.0
  %2202 = vmatprep.subr.mxu0 0.0
  %2203 = vmatpush1.msra.mxu0 0.0
  %2204 = vmatprep.subr.mxu0 0.0
  %2205 = vmatpush1.msra.mxu0 0.0
  %2206 = vmatprep.subr.mxu0 0.0
  %2207 = vmatpush1.msra.mxu0 0.0
  %2208 = vmatprep.mubr.f32.mxu0 0.0
  %2209 = vmatmul.mubr.f32.gmra.mrb[0].mxu0 %v2106
  %v2210 = vpop.f32.mrb[0].mxu0
  %v2211 = vadd.f32 %v2103, %v2210
  %v2212 = vpop.f32.mrb[0].mxu0
  %2213 = vmatprep.mubr.f32.mxu0 0.0
  %2214 = vmatmul.mubr.f32.gmra.mrb[0].mxu0 %v2109
  %v2215 = vpop.f32.mrb[0].mxu0
  %v2216 = vadd.f32 %v2103, %v2215
  %v2217 = vpop.f32.mrb[0].mxu0
  %2218 = vmatprep.mubr.f32.mxu0 0.0
  %2219 = vmatmul.mubr.f32.gmra.mrb[0].mxu0 %v2112
  %v2220 = vpop.f32.mrb[0].mxu0
  %v2221 = vadd.f32 %v2103, %v2220
  %v2222 = vpop.f32.mrb[0].mxu0
  %2223 = vmatprep.mubr.f32.mxu0 0.0
  %2224 = vmatmul.mubr.f32.gmra.mrb[0].mxu0 %v2115
  %v2225 = vpop.f32.mrb[0].mxu0
  %v2226 = vadd.f32 %v2103, %v2225
  %v2227 = vpop.f32.mrb[0].mxu0
  %2228 = vmatprep.mubr.f32.mxu0 0.0
  %2229 = vmatmul.mubr.f32.gmra.mrb[0].mxu0 %v2118
  %v2230 = vpop.f32.mrb[0].mxu0
  %v2231 = vadd.f32 %v2103, %v2230
  %v2232 = vpop.f32.mrb[0].mxu0
  %2233 = vmatprep.mubr.f32.mxu0 0.0
  %2234 = vmatmul.mubr.f32.gmra.mrb[0].mxu0 %v2121
  %v2235 = vpop.f32.mrb[0].mxu0
  %v2236 = vadd.f32 %v2103, %v2235
  %v2237 = vpop.f32.mrb[0].mxu0
  %2238 = vmatprep.mubr.f32.mxu0 0.0
  %2239 = vmatmul.mubr.f32.gmra.mrb[0].mxu0 %v2124
  %v2240 = vpop.f32.mrb[0].mxu0
  %v2241 = vadd.f32 %v2103, %v2240
  %v2242 = vpop.f32.mrb[0].mxu0
  %2243 = vmatprep.mubr.f32.mxu0 0.0
  %2244 = vmatmul.mubr.f32.gmra.mrb[0].mxu0 %v2127
  %v2245 = vpop.f32.mrb[0].mxu0
  %v2246 = vadd.f32 %v2103, %v2245
  %v2247 = vpop.f32.mrb[0].mxu0
  %2248 = vmatprep.mubr.f32.mxu0 0.0
  %2249 = vmatmul.mubr.f32.gmra.mrb[0].mxu0 %v2130
  %v2250 = vpop.f32.mrb[0].mxu0
  %v2251 = vadd.f32 %v2103, %v2250
  %v2252 = vpop.f32.mrb[0].mxu0
  %2253 = vmatprep.mubr.f32.mxu0 0.0
  %2254 = vmatmul.mubr.f32.gmra.mrb[0].mxu0 %v2133
  %v2255 = vpop.f32.mrb[0].mxu0
  %v2256 = vadd.f32 %v2103, %v2255
  %v2257 = vpop.f32.mrb[0].mxu0
  %2258 = vmatprep.mubr.f32.mxu0 0.0
  %2259 = vmatmul.mubr.f32.gmra.mrb[0].mxu0 %v2136
  %v2260 = vpop.f32.mrb[0].mxu0
  %v2261 = vadd.f32 %v2103, %v2260
  %v2262 = vpop.f32.mrb[0].mxu0
  %2263 = vmatprep.mubr.f32.mxu0 0.0
  %2264 = vmatmul.mubr.f32.gmra.mrb[0].mxu0 %v2139
  %v2265 = vpop.f32.mrb[0].mxu0
  %v2266 = vadd.f32 %v2103, %v2265
  %v2267 = vpop.f32.mrb[0].mxu0
  %2268 = vdwg.mxu0
  %v2269 = vtanh.pop %v2211
  %v2270 = vtanh.pop %v2216
  %v2271 = vtanh.pop %v2221
  %v2272 = vtanh.pop %v2226
  %v2273 = vtanh.pop %v2231
  %v2274 = vtanh.pop %v2236
  %v2275 = vtanh.pop %v2241
  %v2276 = vtanh.pop %v2246
  %v2277 = vtanh.pop %v2251
  %v2278 = vtanh.pop %v2256
  %v2279 = vtanh.pop %v2261
  %v2280 = vtanh.pop %v2266
  %v2281 = vld [vmem:[%s9] sm:$0xff]
  %v2282 = vld [vmem:[%s9 + $0x8] sm:$0xff]
  %v2283 = vld [vmem:[%s10] sm:$0x1]
  %v2285 = vlaneseq
  %v2286 = vshrl.u32 %v2285, 7
  %v2287 = vsub.s32 0, %v2286
  %v2288 = vrot.slane %v2283, %v2287
  %vm2290 = vcmask 130048
  %v2292 = vsel %vm2290, %v2269, 0
  %v2295 = vsel %vm2290, %v2270, 0
  %v2298 = vsel %vm2290, %v2271, 0
  %v2301 = vsel %vm2290, %v2272, 0
  %v2304 = vsel %vm2290, %v2273, 0
  %v2307 = vsel %vm2290, %v2274, 0
  %v2310 = vsel %vm2290, %v2275, 0
  %v2313 = vsel %vm2290, %v2276, 0
  %v2316 = vsel %vm2290, %v2277, 0
  %v2319 = vsel %vm2290, %v2278, 0
  %v2322 = vsel %vm2290, %v2279, 0
  %v2325 = vsel %vm2290, %v2280, 0
  %2327 = vmatprep.subr.mxu0 0.0
  %2328 = vmatpush1.msra.mxu0 %v2281
  %2329 = vmatprep.subr.mxu0 0.0
  %2330 = vmatpush1.msra.mxu0 %v2282
  %2331 = vmatprep.subr.mxu0 0.0
  %2332 = vmatpush1.msra.mxu0 0.0
  %2333 = vmatprep.subr.mxu0 0.0
  %2334 = vmatpush1.msra.mxu0 0.0
  %2335 = vmatprep.subr.mxu0 0.0
  %2336 = vmatpush1.msra.mxu0 0.0
  %2337 = vmatprep.subr.mxu0 0.0
  %2338 = vmatpush1.msra.mxu0 0.0
  %2339 = vmatprep.subr.mxu0 0.0
  %2340 = vmatpush1.msra.mxu0 0.0
  %2341 = vmatprep.subr.mxu0 0.0
  %2342 = vmatpush1.msra.mxu0 0.0
  %2343 = vmatprep.subr.mxu0 0.0
  %2344 = vmatpush1.msra.mxu0 0.0
  %2345 = vmatprep.subr.mxu0 0.0
  %2346 = vmatpush1.msra.mxu0 0.0
  %2347 = vmatprep.subr.mxu0 0.0
  %2348 = vmatpush1.msra.mxu0 0.0
  %2349 = vmatprep.subr.mxu0 0.0
  %2350 = vmatpush1.msra.mxu0 0.0
  %2351 = vmatprep.subr.mxu0 0.0
  %2352 = vmatpush1.msra.mxu0 0.0
  %2353 = vmatprep.subr.mxu0 0.0
  %2354 = vmatpush1.msra.mxu0 0.0
  %2355 = vmatprep.subr.mxu0 0.0
  %2356 = vmatpush1.msra.mxu0 0.0
  %2357 = vmatprep.subr.mxu0 0.0
  %2358 = vmatpush1.msra.mxu0 0.0
  %2359 = vmatprep.subr.mxu0 0.0
  %2360 = vmatpush1.msra.mxu0 0.0
  %2361 = vmatprep.subr.mxu0 0.0
  %2362 = vmatpush1.msra.mxu0 0.0
  %2363 = vmatprep.subr.mxu0 0.0
  %2364 = vmatpush1.msra.mxu0 0.0
  %2365 = vmatprep.subr.mxu0 0.0
  %2366 = vmatpush1.msra.mxu0 0.0
  %2367 = vmatprep.subr.mxu0 0.0
  %2368 = vmatpush1.msra.mxu0 0.0
  %2369 = vmatprep.subr.mxu0 0.0
  %2370 = vmatpush1.msra.mxu0 0.0
  %2371 = vmatprep.subr.mxu0 0.0
  %2372 = vmatpush1.msra.mxu0 0.0
  %2373 = vmatprep.subr.mxu0 0.0
  %2374 = vmatpush1.msra.mxu0 0.0
  %2375 = vmatprep.subr.mxu0 0.0
  %2376 = vmatpush1.msra.mxu0 0.0
  %2377 = vmatprep.subr.mxu0 0.0
  %2378 = vmatpush1.msra.mxu0 0.0
  %2379 = vmatprep.subr.mxu0 0.0
  %2380 = vmatpush1.msra.mxu0 0.0
  %2381 = vmatprep.subr.mxu0 0.0
  %2382 = vmatpush1.msra.mxu0 0.0
  %2383 = vmatprep.subr.mxu0 0.0
  %2384 = vmatpush1.msra.mxu0 0.0
  %2385 = vmatprep.subr.mxu0 0.0
  %2386 = vmatpush1.msra.mxu0 0.0
  %2387 = vmatprep.subr.mxu0 0.0
  %2388 = vmatpush1.msra.mxu0 0.0
  %2389 = vmatprep.subr.mxu0 0.0
  %2390 = vmatpush1.msra.mxu0 0.0
  %2391 = vmatprep.mubr.f32.mxu0 0.0
  %2392 = vmatmul.mubr.f32.gmra.mrb[0].mxu0 %v2292
  %v2393 = vpop.f32.mrb[0].mxu0
  %v2394 = vadd.f32 %v2288, %v2393
  %v2395 = vpop.f32.mrb[0].mxu0
  %2396 = vmatprep.mubr.f32.mxu0 0.0
  %2397 = vmatmul.mubr.f32.gmra.mrb[0].mxu0 %v2295
  %v2398 = vpop.f32.mrb[0].mxu0
  %v2399 = vadd.f32 %v2288, %v2398
  %v2400 = vpop.f32.mrb[0].mxu0
  %2401 = vmatprep.mubr.f32.mxu0 0.0
  %2402 = vmatmul.mubr.f32.gmra.mrb[0].mxu0 %v2298
  %v2403 = vpop.f32.mrb[0].mxu0
  %v2404 = vadd.f32 %v2288, %v2403
  %v2405 = vpop.f32.mrb[0].mxu0
  %2406 = vmatprep.mubr.f32.mxu0 0.0
  %2407 = vmatmul.mubr.f32.gmra.mrb[0].mxu0 %v2301
  %v2408 = vpop.f32.mrb[0].mxu0
  %v2409 = vadd.f32 %v2288, %v2408
  %v2410 = vpop.f32.mrb[0].mxu0
  %2411 = vmatprep.mubr.f32.mxu0 0.0
  %2412 = vmatmul.mubr.f32.gmra.mrb[0].mxu0 %v2304
  %v2413 = vpop.f32.mrb[0].mxu0
  %v2414 = vadd.f32 %v2288, %v2413
  %v2415 = vpop.f32.mrb[0].mxu0
  %2416 = vmatprep.mubr.f32.mxu0 0.0
  %2417 = vmatmul.mubr.f32.gmra.mrb[0].mxu0 %v2307
  %v2418 = vpop.f32.mrb[0].mxu0
  %v2419 = vadd.f32 %v2288, %v2418
  %v2420 = vpop.f32.mrb[0].mxu0
  %2421 = vmatprep.mubr.f32.mxu0 0.0
  %2422 = vmatmul.mubr.f32.gmra.mrb[0].mxu0 %v2310
  %v2423 = vpop.f32.mrb[0].mxu0
  %v2424 = vadd.f32 %v2288, %v2423
  %v2425 = vpop.f32.mrb[0].mxu0
  %2426 = vmatprep.mubr.f32.mxu0 0.0
  %2427 = vmatmul.mubr.f32.gmra.mrb[0].mxu0 %v2313
  %v2428 = vpop.f32.mrb[0].mxu0
  %v2429 = vadd.f32 %v2288, %v2428
  %v2430 = vpop.f32.mrb[0].mxu0
  %2431 = vmatprep.mubr.f32.mxu0 0.0
  %2432 = vmatmul.mubr.f32.gmra.mrb[0].mxu0 %v2316
  %v2433 = vpop.f32.mrb[0].mxu0
  %v2434 = vadd.f32 %v2288, %v2433
  %v2435 = vpop.f32.mrb[0].mxu0
  %2436 = vmatprep.mubr.f32.mxu0 0.0
  %2437 = vmatmul.mubr.f32.gmra.mrb[0].mxu0 %v2319
  %v2438 = vpop.f32.mrb[0].mxu0
  %v2439 = vadd.f32 %v2288, %v2438
  %v2440 = vpop.f32.mrb[0].mxu0
  %2441 = vmatprep.mubr.f32.mxu0 0.0
  %2442 = vmatmul.mubr.f32.gmra.mrb[0].mxu0 %v2322
  %v2443 = vpop.f32.mrb[0].mxu0
  %v2444 = vadd.f32 %v2288, %v2443
  %v2445 = vpop.f32.mrb[0].mxu0
  %2446 = vmatprep.mubr.f32.mxu0 0.0
  %2447 = vmatmul.mubr.f32.gmra.mrb[0].mxu0 %v2325
  %v2448 = vpop.f32.mrb[0].mxu0
  %v2449 = vadd.f32 %v2288, %v2448
  %v2450 = vpop.f32.mrb[0].mxu0
  %2451 = vdwg.mxu0
  %vm2452 = vcmask 23552
  %2453 = vst.msk [vmem:[%s11] sm:$0xff] %vm2452, %v2394
  %2454 = vst.msk [vmem:[%s11 + $0x8] sm:$0xff] %vm2452, %v2399
  %2455 = vst.msk [vmem:[%s11 + $0x10] sm:$0xff] %vm2452, %v2404
  %2456 = vst.msk [vmem:[%s11 + $0x18] sm:$0xff] %vm2452, %v2409
  %2457 = vst.msk [vmem:[%s11 + $0x20] sm:$0xff] %vm2452, %v2414
  %2458 = vst.msk [vmem:[%s11 + $0x28] sm:$0xff] %vm2452, %v2419
  %2459 = vst.msk [vmem:[%s11 + $0x30] sm:$0xff] %vm2452, %v2424
  %2460 = vst.msk [vmem:[%s11 + $0x38] sm:$0xff] %vm2452, %v2429
  %2461 = vst.msk [vmem:[%s11 + $0x40] sm:$0xff] %vm2452, %v2434
  %2462 = vst.msk [vmem:[%s11 + $0x48] sm:$0xff] %vm2452, %v2439
  %2463 = vst.msk [vmem:[%s11 + $0x50] sm:$0xff] %vm2452, %v2444
  %2464 = vst.msk [vmem:[%s11 + $0x58] sm:$0xff] %vm2452, %v2449
  // Predicated region
  $region50: #{tpu_custom_call.1} parent=0 // pred_check
    _
  $region51: #{tpu_custom_call.1} parent=0 // pred_check_branch
    %2466 = sbr.rel (0) target = $region53
  $region52: #{tpu_custom_call.1} parent=0 // pred_region
    _
  $region53: #{tpu_custom_call.1} parent=0 // pred_fallthru
    _
  // Predicated region
  $region54: #{tpu_custom_call.1} parent=0 // pred_check
    _
  $region55: #{tpu_custom_call.1} parent=0 // pred_check_branch
    %2468 = sbr.rel (0) target = $region57
  $region56: #{tpu_custom_call.1} parent=0 // pred_region
    _
  $region57: #{tpu_custom_call.1} parent=0 // pred_fallthru
    _

</llo_original>
